<compile_context>
chip_gen: v7x
topology: tpu7x:2x2x1
jax: 0.10.0
libtpu: 0.0.40
codegen_flags: <defaults>
</compile_context>

<pallas_src>
import math

import jax
import jax.numpy as jnp
import numpy as np
from jax.experimental import pallas as pl
from jax.experimental.pallas import tpu as pltpu


# ----------------------------------------------------------------------------
# Fused kernel.  One grid step = BN batch elements; all tensors are
# (channels, time) with time on lanes; every conv = K accumulated MXU dots.
# ----------------------------------------------------------------------------
def _make_fused_kernel(BN, L, K, C_in, C_out, has_downsample, compute_dtype):
    pad = K - 1

    def kernel(*refs):
        if has_downsample:
            (x_ref, wA1, bA1, wA2, bA2, wB1, bB1, wB2, bB2, wd, bd,
             o_ref, xpad_ref) = refs
        else:
            (x_ref, wA1, bA1, wA2, bA2, wB1, bB1, wB2, bB2,
             o_ref, xpad_ref) = refs

        # Zero the causal-pad lanes once per grid step.  Deliberately NOT
        # gated behind pl.program_id(0) == 0: with ("parallel",) semantics a
        # second TensorCore's first iteration is not program_id 0 and its
        # scratch would be uninitialized.  Data writes never touch these lanes.
        if pad > 0:
            xpad_ref[:, :pad] = jnp.zeros(
                (xpad_ref.shape[0], pad), xpad_ref.dtype)

        def causal_conv(v, w_ref, b_ref):
            """v: (cin, L) f32 -> causal conv + bias -> (cout, L) f32."""
            cin = v.shape[0]
            cout = w_ref.shape[1]
            if pad > 0:
                # One lane-shifted store into the compute-dtype scratch; each
                # tap reads a (cin, L) lane window.  K accumulated dots with
                # f32 accumulation instead of an im2col concat (no K*Cin-wide
                # cols tensor; v7x MRB accumulates successive matmuls free).
                xpad_ref[:cin, pad:] = v.astype(xpad_ref.dtype)
                acc = jnp.zeros((cout, L), jnp.float32)
                for k in range(K):
                    acc += jnp.dot(w_ref[k], xpad_ref[:cin, k:k + L],
                                   preferred_element_type=jnp.float32)
            else:
                acc = jnp.dot(w_ref[0], v.astype(compute_dtype),
                              preferred_element_type=jnp.float32)
            return acc + b_ref[...]

        for b in range(BN):                               # static unroll
            x32 = x_ref[b].astype(jnp.float32)            # (C_in, L)

            # --- res1 (+) res2: block-diagonal grouped convs on all channels -
            h = jnp.maximum(causal_conv(x32, wA1, bA1), 0.0)
            # TODO(synk): dropout is stochastic/training-only -> identity (eval).
            h = jnp.maximum(causal_conv(h, wA2, bA2), 0.0)
            y = jnp.maximum(h + x32, 0.0)   # == concat(res1(x1), res2(x2))

            # --- final residual block ---------------------------------------
            g = jnp.maximum(causal_conv(y, wB1, bB1), 0.0)
            g = jnp.maximum(causal_conv(g, wB2, bB2), 0.0)
            if has_downsample:
                res = jnp.dot(wd[...], y.astype(wd.dtype),
                              preferred_element_type=jnp.float32) + bd[...]
            else:
                res = y                      # C_in == C_out
            o_ref[b] = jnp.maximum(g + res, 0.0).astype(o_ref.dtype)

    return kernel


# ----------------------------------------------------------------------------
# One-time weight re-layout (hoisted out of the forward path).
# ----------------------------------------------------------------------------
def _tap_weights(w):
    """(Cout, Cin, K) conv1d weight -> (K, Cout, Cin) per-tap matrices."""
    return jnp.transpose(w, (2, 0, 1))


def _tap_weights_blockdiag(wa, wb):
    """Two square convs (ca,ca,K) & (cb,cb,K) -> per-tap block-diag
    (K, ca+cb, ca+cb) so res1/res2 run as one grouped conv."""
    ca, _, K = wa.shape
    cb = wb.shape[0]
    wa_t = jnp.transpose(wa, (2, 0, 1))
    wb_t = jnp.transpose(wb, (2, 0, 1))
    top = jnp.concatenate([wa_t, jnp.zeros((K, ca, cb), wa.dtype)], axis=2)
    bot = jnp.concatenate([jnp.zeros((K, cb, ca), wb.dtype), wb_t], axis=2)
    return jnp.concatenate([top, bot], axis=1)


def prepare_merge_params(params, compute_dtype=jnp.bfloat16):
    r1, r2, rf = params["res1"], params["res2"], params["res"]
    # Fused identity residual (y = h + x) needs res1/res2 square (no per-half
    # downsample) -- guaranteed by the module, asserted per the review.
    assert "wd" not in r1 and "wd" not in r2
    C_out, C_in, K = rf["w1"].shape
    cd = compute_dtype
    prep = {
        "wA1": _tap_weights_blockdiag(r1["w1"], r2["w1"]).astype(cd),
        "bA1": jnp.concatenate([r1["b1"], r2["b1"]]).reshape(C_in, 1).astype(jnp.float32),
        "wA2": _tap_weights_blockdiag(r1["w2"], r2["w2"]).astype(cd),
        "bA2": jnp.concatenate([r1["b2"], r2["b2"]]).reshape(C_in, 1).astype(jnp.float32),
        "wB1": _tap_weights(rf["w1"]).astype(cd),
        "bB1": rf["b1"].reshape(C_out, 1).astype(jnp.float32),
        "wB2": _tap_weights(rf["w2"]).astype(cd),
        "bB2": rf["b2"].reshape(C_out, 1).astype(jnp.float32),
    }
    has_downsample = "wd" in rf
    if has_downsample:
        prep["wd"] = rf["wd"][:, :, 0].astype(cd)            # (C_out, C_in)
        prep["bd"] = rf["bd"].reshape(C_out, 1).astype(jnp.float32)
    meta = dict(K=K, C_in=C_in, C_out=C_out,
                has_downsample=has_downsample, compute_dtype=cd)
    return prep, meta


# ----------------------------------------------------------------------------
# Tile sizing / VMEM budgeting.
# ----------------------------------------------------------------------------
def _padded_bytes(shape, dtype):
    """Bytes of one VMEM buffer after (sublane, lane) layout padding."""
    dt = jnp.dtype(dtype)
    sub = 8 * max(1, 4 // dt.itemsize)            # 8 rows f32, 16 rows bf16
    shape = (1,) * max(0, 2 - len(shape)) + tuple(shape)
    lead = int(np.prod(shape[:-2], dtype=np.int64)) if len(shape) > 2 else 1
    rows = -(-shape[-2] // sub) * sub
    cols = -(-shape[-1] // 128) * 128
    return int(lead * rows * cols * dt.itemsize)


def _pick_batch_tile(N, C_in, C_out, L, x_dtype,
                     budget_bytes=16 << 20, max_bn=8):
    """Batch elements per grid step: sized against a VMEM budget (v7x has only
    64 MiB chip / 32 MiB default scoped), capped for unroll size, and keeping
    the grid >= 2 steps so both TensorCores get work on v7x / megacore."""
    per_b = 2 * (_padded_bytes((C_in, L), x_dtype)
                 + _padded_bytes((C_out, L), x_dtype))      # double-buffered
    bn = max(1, min(N, max_bn, budget_bytes // max(per_b, 1)))
    if N >= 2:
        bn = min(bn, N // 2)
    bn = max(bn, 1)
    while N % bn:
        bn -= 1
    return bn


# ----------------------------------------------------------------------------
# Wrapper: one fused pallas_call, no wrapper-side layout ops.
# ----------------------------------------------------------------------------
def residual_block_merge_pallas(x_ncl, prep, meta):
    """x_ncl: (N, C_in, L) float32 -> (N, C_out, L) float32."""
    K, C_in, C_out = meta["K"], meta["C_in"], meta["C_out"]
    has_ds = meta["has_downsample"]
    cd = meta["compute_dtype"]
    N, C, L = x_ncl.shape
    assert C == C_in

    BN = _pick_batch_tile(N, C_in, C_out, L, x_ncl.dtype)
    grid = (N // BN,)
    Cmax = max(C_in, C_out)

    def full_spec(arr):
        nd = arr.ndim
        return pl.BlockSpec(arr.shape, lambda n, _nd=nd: (0,) * _nd)

    # NOTE: weight/bias blocks have constant index maps and are never
    # re-fetched; pl.Buffered(1) would single-buffer them (small v7x VMEM
    # saving) but is skipped here for lowering portability.
    inputs = [x_ncl, prep["wA1"], prep["bA1"], prep["wA2"], prep["bA2"],
              prep["wB1"], prep["bB1"], prep["wB2"], prep["bB2"]]
    if has_ds:
        inputs += [prep["wd"], prep["bd"]]
    in_specs = ([pl.BlockSpec((BN, C_in, L), lambda n: (n, 0, 0))]
                + [full_spec(a) for a in inputs[1:]])

    # Explicit scoped-VMEM limit: generous headroom, v7x-safe cap.
    est = (2 * sum(_padded_bytes(a.shape, a.dtype) for a in inputs[1:])
           + 2 * _padded_bytes((BN, C_in, L), x_ncl.dtype)
           + 2 * _padded_bytes((BN, C_out, L), x_ncl.dtype)
           + _padded_bytes((Cmax, L + K - 1), cd))
    vmem_limit = int(min(48 << 20, max(8 << 20, 4 * est)))

    kernel = _make_fused_kernel(BN, L, K, C_in, C_out, has_ds, cd)
    return pl.pallas_call(
        kernel,
        out_shape=jax.ShapeDtypeStruct((N, C_out, L), x_ncl.dtype),
        grid=grid,
        in_specs=in_specs,
        out_specs=pl.BlockSpec((BN, C_out, L), lambda n: (n, 0, 0)),
        scratch_shapes=[pltpu.VMEM((Cmax, L + K - 1), cd)],
        compiler_params=pltpu.CompilerParams(
            dimension_semantics=("parallel",),
            vmem_limit_bytes=vmem_limit),
    )(*inputs)


# ----------------------------------------------------------------------------
# Parameter init (PyTorch Conv1d layout) + pure-JAX reference.
# ----------------------------------------------------------------------------
def init_residual_block(key, in_ch, out_ch, K):
    k1, k2, k3, k4, k5, k6 = jax.random.split(key, 6)
    s1 = 1.0 / math.sqrt(in_ch * K)
    s2 = 1.0 / math.sqrt(out_ch * K)
    p = {
        "w1": jax.random.uniform(k1, (out_ch, in_ch, K), jnp.float32, -s1, s1),
        "b1": jax.random.uniform(k2, (out_ch,), jnp.float32, -s1, s1),
        "w2": jax.random.uniform(k3, (out_ch, out_ch, K), jnp.float32, -s2, s2),
        "b2": jax.random.uniform(k4, (out_ch,), jnp.float32, -s2, s2),
    }
    if in_ch != out_ch:
        sd = 1.0 / math.sqrt(in_ch)
        p["wd"] = jax.random.uniform(k5, (out_ch, in_ch, 1), jnp.float32, -sd, sd)
        p["bd"] = jax.random.uniform(k6, (out_ch,), jnp.float32, -sd, sd)
    return p


def init_residual_block_merge(key, in_ch, out_ch, K):
    k1, k2, k3 = jax.random.split(key, 3)
    return {
        "res1": init_residual_block(k1, in_ch // 2, in_ch // 2, K),
        "res2": init_residual_block(k2, math.ceil(in_ch / 2), math.ceil(in_ch / 2), K),
        "res":  init_residual_block(k3, in_ch, out_ch, K),
    }


def _causal_conv1d_ref(x, w, b):
    K = w.shape[-1]
    xp = jnp.pad(x, ((0, 0), (0, 0), (K - 1, 0)))
    y = jax.lax.conv_general_dilated(
        xp, w, window_strides=(1,), padding="VALID",
        dimension_numbers=("NCH", "OIH", "NCH"))
    return y + b[None, :, None]


def residual_block_ref(x, p):
    h = jnp.maximum(_causal_conv1d_ref(x, p["w1"], p["b1"]), 0.0)
    h = jnp.maximum(_causal_conv1d_ref(h, p["w2"], p["b2"]), 0.0)
    res = _causal_conv1d_ref(x, p["wd"], p["bd"]) if "wd" in p else x
    return jnp.maximum(h + res, 0.0)


def residual_block_merge_ref(x, params):
    half = x.shape[1] // 2
    y1 = residual_block_ref(x[:, :half, :], params["res1"])
    y2 = residual_block_ref(x[:, half:, :], params["res2"])
    y = jnp.concatenate([y1, y2], axis=1)
    return residual_block_ref(y, params["res"])


# ----------------------------------------------------------------------------
if __name__ == "__main__":
    key = jax.random.PRNGKey(0)
    kx, kp = jax.random.split(key)

    N, C_in, C_out, L, K = 2, 8, 16, 16, 3      # dropout=0.1 -> identity (eval)
    x = jax.random.normal(kx, (N, C_in, L), jnp.float32)
    params = init_residual_block_merge(kp, C_in, C_out, K)

    ref = residual_block_merge_ref(x, params)

    # f32 MXU operands: tight check against the f32 reference.
    prep32, meta32 = prepare_merge_params(params, compute_dtype=jnp.float32)
    out32 = jax.block_until_ready(residual_block_merge_pallas(x, prep32, meta32))
    np.testing.assert_allclose(np.asarray(out32), np.asarray(ref),
                               rtol=1e-3, atol=1e-3)

    # bf16 MXU operands (perf default on v6e/v7x), f32 accumulation.
    prep16, meta16 = prepare_merge_params(params, compute_dtype=jnp.bfloat16)
    out16 = jax.block_until_ready(residual_block_merge_pallas(x, prep16, meta16))
    np.testing.assert_allclose(np.asarray(out16), np.asarray(ref),
                               rtol=5e-2, atol=5e-2)

    assert out32.shape == (N, C_out, L) and out16.shape == (N, C_out, L)
    print("KERNEL_OK")
</pallas_src>

<mosaic_0001>
module attributes {stable_mosaic.version = 11 : i64} {
  func.func @kernel(%arg0: i32, %arg1: memref<1x8x16xf32, #tpu.memory_space<vmem>>, %arg2: memref<3x8x8xf32, #tpu.memory_space<vmem>>, %arg3: memref<8x1xf32, #tpu.memory_space<vmem>>, %arg4: memref<3x8x8xf32, #tpu.memory_space<vmem>>, %arg5: memref<8x1xf32, #tpu.memory_space<vmem>>, %arg6: memref<3x16x8xf32, #tpu.memory_space<vmem>>, %arg7: memref<16x1xf32, #tpu.memory_space<vmem>>, %arg8: memref<3x16x16xf32, #tpu.memory_space<vmem>>, %arg9: memref<16x1xf32, #tpu.memory_space<vmem>>, %arg10: memref<16x8xf32, #tpu.memory_space<vmem>>, %arg11: memref<16x1xf32, #tpu.memory_space<vmem>>, %arg12: memref<1x16x16xf32, #tpu.memory_space<vmem>>, %arg13: memref<16x18xf32, #tpu.memory_space<vmem>>) attributes {dimension_semantics = [#tpu.dimension_semantics<parallel>], iteration_bounds = array<i64: 2>, scalar_prefetch = 0 : i64, scratch_operands = 1 : i64, tpu.core_type = #tpu.core_type<tc>, window_params = [{transform_indices = @transform_0, window_bounds = array<i64: 1, 8, 16>}, {pipeline_mode = #tpu.pipeline_mode<synchronous>, transform_indices = @transform_1, window_bounds = array<i64: 3, 8, 8>}, {pipeline_mode = #tpu.pipeline_mode<synchronous>, transform_indices = @transform_2, window_bounds = array<i64: 8, 1>}, {pipeline_mode = #tpu.pipeline_mode<synchronous>, transform_indices = @transform_3, window_bounds = array<i64: 3, 8, 8>}, {pipeline_mode = #tpu.pipeline_mode<synchronous>, transform_indices = @transform_4, window_bounds = array<i64: 8, 1>}, {pipeline_mode = #tpu.pipeline_mode<synchronous>, transform_indices = @transform_5, window_bounds = array<i64: 3, 16, 8>}, {pipeline_mode = #tpu.pipeline_mode<synchronous>, transform_indices = @transform_6, window_bounds = array<i64: 16, 1>}, {pipeline_mode = #tpu.pipeline_mode<synchronous>, transform_indices = @transform_7, window_bounds = array<i64: 3, 16, 16>}, {pipeline_mode = #tpu.pipeline_mode<synchronous>, transform_indices = @transform_8, window_bounds = array<i64: 16, 1>}, {pipeline_mode = #tpu.pipeline_mode<synchronous>, transform_indices = @transform_9, window_bounds = array<i64: 16, 8>}, {pipeline_mode = #tpu.pipeline_mode<synchronous>, transform_indices = @transform_10, window_bounds = array<i64: 16, 1>}, {transform_indices = @transform_11, window_bounds = array<i64: 1, 16, 16>}]} {
    %cst = arith.constant 0.000000e+00 : f32
    %0 = vector.broadcast %cst : f32 to vector<16x2xf32>
    %c0 = arith.constant 0 : index
    %c0_0 = arith.constant 0 : index
    %1 = vector.load %arg13[%c0, %c0_0] : memref<16x18xf32, #tpu.memory_space<vmem>>, vector<16x2xf32>
    tpu.vector_store %arg13[%c0, %c0_0], %0 {strides = array<i32>} : memref<16x18xf32, #tpu.memory_space<vmem>>, vector<16x2xf32>,
    %c0_1 = arith.constant 0 : index
    %c0_2 = arith.constant 0 : index
    %c0_3 = arith.constant 0 : index
    %2 = vector.load %arg1[%c0_1, %c0_2, %c0_3] : memref<1x8x16xf32, #tpu.memory_space<vmem>>, vector<1x8x16xf32>
    %3 = vector.shape_cast %2 : vector<1x8x16xf32> to vector<8x16xf32>
    %c0_4 = arith.constant 0 : index
    %c2 = arith.constant 2 : index
    %4 = vector.load %arg13[%c0_4, %c2] : memref<16x18xf32, #tpu.memory_space<vmem>>, vector<8x16xf32>
    tpu.vector_store %arg13[%c0_4, %c2], %3 {strides = array<i32>} : memref<16x18xf32, #tpu.memory_space<vmem>>, vector<8x16xf32>,
    %cst_5 = arith.constant 0.000000e+00 : f32
    %5 = vector.broadcast %cst_5 : f32 to vector<8x16xf32>
    %c0_6 = arith.constant 0 : index
    %c0_7 = arith.constant 0 : index
    %c0_8 = arith.constant 0 : index
    %6 = vector.load %arg2[%c0_6, %c0_7, %c0_8] : memref<3x8x8xf32, #tpu.memory_space<vmem>>, vector<1x8x8xf32>
    %7 = vector.shape_cast %6 : vector<1x8x8xf32> to vector<8x8xf32>
    %c0_9 = arith.constant 0 : index
    %c0_10 = arith.constant 0 : index
    %8 = vector.load %arg13[%c0_9, %c0_10] : memref<16x18xf32, #tpu.memory_space<vmem>>, vector<8x16xf32>
    %cst_11 = arith.constant dense<0.000000e+00> : vector<8x16xf32>
    %9 = tpu.matmul %7, %8, %cst_11 {dimension_numbers = #tpu.dot_dimension_numbers<[1], [0], [0], [1], [0, 0, 1, 1], [], []>} : vector<8x8xf32>, vector<8x16xf32>, vector<8x16xf32> -> vector<8x16xf32>
    %10 = arith.addf %5, %9 : vector<8x16xf32>
    %c1 = arith.constant 1 : index
    %c0_12 = arith.constant 0 : index
    %c0_13 = arith.constant 0 : index
    %11 = vector.load %arg2[%c1, %c0_12, %c0_13] : memref<3x8x8xf32, #tpu.memory_space<vmem>>, vector<1x8x8xf32>
    %12 = vector.shape_cast %11 : vector<1x8x8xf32> to vector<8x8xf32>
    %c0_14 = arith.constant 0 : index
    %c1_15 = arith.constant 1 : index
    %13 = vector.load %arg13[%c0_14, %c1_15] : memref<16x18xf32, #tpu.memory_space<vmem>>, vector<8x16xf32>
    %cst_16 = arith.constant dense<0.000000e+00> : vector<8x16xf32>
    %14 = tpu.matmul %12, %13, %cst_16 {dimension_numbers = #tpu.dot_dimension_numbers<[1], [0], [0], [1], [0, 0, 1, 1], [], []>} : vector<8x8xf32>, vector<8x16xf32>, vector<8x16xf32> -> vector<8x16xf32>
    %15 = arith.addf %10, %14 : vector<8x16xf32>
    %c2_17 = arith.constant 2 : index
    %c0_18 = arith.constant 0 : index
    %c0_19 = arith.constant 0 : index
    %16 = vector.load %arg2[%c2_17, %c0_18, %c0_19] : memref<3x8x8xf32, #tpu.memory_space<vmem>>, vector<1x8x8xf32>
    %17 = vector.shape_cast %16 : vector<1x8x8xf32> to vector<8x8xf32>
    %c0_20 = arith.constant 0 : index
    %c2_21 = arith.constant 2 : index
    %18 = vector.load %arg13[%c0_20, %c2_21] : memref<16x18xf32, #tpu.memory_space<vmem>>, vector<8x16xf32>
    %cst_22 = arith.constant dense<0.000000e+00> : vector<8x16xf32>
    %19 = tpu.matmul %17, %18, %cst_22 {dimension_numbers = #tpu.dot_dimension_numbers<[1], [0], [0], [1], [0, 0, 1, 1], [], []>} : vector<8x8xf32>, vector<8x16xf32>, vector<8x16xf32> -> vector<8x16xf32>
    %20 = arith.addf %15, %19 : vector<8x16xf32>
    %c0_23 = arith.constant 0 : index
    %c0_24 = arith.constant 0 : index
    %21 = vector.load %arg3[%c0_23, %c0_24] : memref<8x1xf32, #tpu.memory_space<vmem>>, vector<8x1xf32>
    %22 = vector.broadcast %21 : vector<8x1xf32> to vector<8x16xf32>
    %23 = arith.addf %20, %22 : vector<8x16xf32>
    %cst_25 = arith.constant 0.000000e+00 : f32
    %24 = vector.broadcast %cst_25 : f32 to vector<8x16xf32>
    %25 = arith.maximumf %23, %24 : vector<8x16xf32>
    %c0_26 = arith.constant 0 : index
    %c2_27 = arith.constant 2 : index
    %26 = vector.load %arg13[%c0_26, %c2_27] : memref<16x18xf32, #tpu.memory_space<vmem>>, vector<8x16xf32>
    tpu.vector_store %arg13[%c0_26, %c2_27], %25 {strides = array<i32>} : memref<16x18xf32, #tpu.memory_space<vmem>>, vector<8x16xf32>,
    %cst_28 = arith.constant 0.000000e+00 : f32
    %27 = vector.broadcast %cst_28 : f32 to vector<8x16xf32>
    %c0_29 = arith.constant 0 : index
    %c0_30 = arith.constant 0 : index
    %c0_31 = arith.constant 0 : index
    %28 = vector.load %arg4[%c0_29, %c0_30, %c0_31] : memref<3x8x8xf32, #tpu.memory_space<vmem>>, vector<1x8x8xf32>
    %29 = vector.shape_cast %28 : vector<1x8x8xf32> to vector<8x8xf32>
    %c0_32 = arith.constant 0 : index
    %c0_33 = arith.constant 0 : index
    %30 = vector.load %arg13[%c0_32, %c0_33] : memref<16x18xf32, #tpu.memory_space<vmem>>, vector<8x16xf32>
    %cst_34 = arith.constant dense<0.000000e+00> : vector<8x16xf32>
    %31 = tpu.matmul %29, %30, %cst_34 {dimension_numbers = #tpu.dot_dimension_numbers<[1], [0], [0], [1], [0, 0, 1, 1], [], []>} : vector<8x8xf32>, vector<8x16xf32>, vector<8x16xf32> -> vector<8x16xf32>
    %32 = arith.addf %27, %31 : vector<8x16xf32>
    %c1_35 = arith.constant 1 : index
    %c0_36 = arith.constant 0 : index
    %c0_37 = arith.constant 0 : index
    %33 = vector.load %arg4[%c1_35, %c0_36, %c0_37] : memref<3x8x8xf32, #tpu.memory_space<vmem>>, vector<1x8x8xf32>
    %34 = vector.shape_cast %33 : vector<1x8x8xf32> to vector<8x8xf32>
    %c0_38 = arith.constant 0 : index
    %c1_39 = arith.constant 1 : index
    %35 = vector.load %arg13[%c0_38, %c1_39] : memref<16x18xf32, #tpu.memory_space<vmem>>, vector<8x16xf32>
    %cst_40 = arith.constant dense<0.000000e+00> : vector<8x16xf32>
    %36 = tpu.matmul %34, %35, %cst_40 {dimension_numbers = #tpu.dot_dimension_numbers<[1], [0], [0], [1], [0, 0, 1, 1], [], []>} : vector<8x8xf32>, vector<8x16xf32>, vector<8x16xf32> -> vector<8x16xf32>
    %37 = arith.addf %32, %36 : vector<8x16xf32>
    %c2_41 = arith.constant 2 : index
    %c0_42 = arith.constant 0 : index
    %c0_43 = arith.constant 0 : index
    %38 = vector.load %arg4[%c2_41, %c0_42, %c0_43] : memref<3x8x8xf32, #tpu.memory_space<vmem>>, vector<1x8x8xf32>
    %39 = vector.shape_cast %38 : vector<1x8x8xf32> to vector<8x8xf32>
    %c0_44 = arith.constant 0 : index
    %c2_45 = arith.constant 2 : index
    %40 = vector.load %arg13[%c0_44, %c2_45] : memref<16x18xf32, #tpu.memory_space<vmem>>, vector<8x16xf32>
    %cst_46 = arith.constant dense<0.000000e+00> : vector<8x16xf32>
    %41 = tpu.matmul %39, %40, %cst_46 {dimension_numbers = #tpu.dot_dimension_numbers<[1], [0], [0], [1], [0, 0, 1, 1], [], []>} : vector<8x8xf32>, vector<8x16xf32>, vector<8x16xf32> -> vector<8x16xf32>
    %42 = arith.addf %37, %41 : vector<8x16xf32>
    %c0_47 = arith.constant 0 : index
    %c0_48 = arith.constant 0 : index
    %43 = vector.load %arg5[%c0_47, %c0_48] : memref<8x1xf32, #tpu.memory_space<vmem>>, vector<8x1xf32>
    %44 = vector.broadcast %43 : vector<8x1xf32> to vector<8x16xf32>
    %45 = arith.addf %42, %44 : vector<8x16xf32>
    %cst_49 = arith.constant 0.000000e+00 : f32
    %46 = vector.broadcast %cst_49 : f32 to vector<8x16xf32>
    %47 = arith.maximumf %45, %46 : vector<8x16xf32>
    %48 = arith.addf %47, %3 : vector<8x16xf32>
    %cst_50 = arith.constant 0.000000e+00 : f32
    %49 = vector.broadcast %cst_50 : f32 to vector<8x16xf32>
    %50 = arith.maximumf %48, %49 : vector<8x16xf32>
    %c0_51 = arith.constant 0 : index
    %c2_52 = arith.constant 2 : index
    %51 = vector.load %arg13[%c0_51, %c2_52] : memref<16x18xf32, #tpu.memory_space<vmem>>, vector<8x16xf32>
    tpu.vector_store %arg13[%c0_51, %c2_52], %50 {strides = array<i32>} : memref<16x18xf32, #tpu.memory_space<vmem>>, vector<8x16xf32>,
    %cst_53 = arith.constant 0.000000e+00 : f32
    %52 = vector.broadcast %cst_53 : f32 to vector<16x16xf32>
    %c0_54 = arith.constant 0 : index
    %c0_55 = arith.constant 0 : index
    %c0_56 = arith.constant 0 : index
    %53 = vector.load %arg6[%c0_54, %c0_55, %c0_56] : memref<3x16x8xf32, #tpu.memory_space<vmem>>, vector<1x16x8xf32>
    %54 = vector.shape_cast %53 : vector<1x16x8xf32> to vector<16x8xf32>
    %c0_57 = arith.constant 0 : index
    %c0_58 = arith.constant 0 : index
    %55 = vector.load %arg13[%c0_57, %c0_58] : memref<16x18xf32, #tpu.memory_space<vmem>>, vector<8x16xf32>
    %cst_59 = arith.constant dense<0.000000e+00> : vector<16x16xf32>
    %56 = tpu.matmul %54, %55, %cst_59 {dimension_numbers = #tpu.dot_dimension_numbers<[1], [0], [0], [1], [0, 0, 1, 1], [], []>} : vector<16x8xf32>, vector<8x16xf32>, vector<16x16xf32> -> vector<16x16xf32>
    %57 = arith.addf %52, %56 : vector<16x16xf32>
    %c1_60 = arith.constant 1 : index
    %c0_61 = arith.constant 0 : index
    %c0_62 = arith.constant 0 : index
    %58 = vector.load %arg6[%c1_60, %c0_61, %c0_62] : memref<3x16x8xf32, #tpu.memory_space<vmem>>, vector<1x16x8xf32>
    %59 = vector.shape_cast %58 : vector<1x16x8xf32> to vector<16x8xf32>
    %c0_63 = arith.constant 0 : index
    %c1_64 = arith.constant 1 : index
    %60 = vector.load %arg13[%c0_63, %c1_64] : memref<16x18xf32, #tpu.memory_space<vmem>>, vector<8x16xf32>
    %cst_65 = arith.constant dense<0.000000e+00> : vector<16x16xf32>
    %61 = tpu.matmul %59, %60, %cst_65 {dimension_numbers = #tpu.dot_dimension_numbers<[1], [0], [0], [1], [0, 0, 1, 1], [], []>} : vector<16x8xf32>, vector<8x16xf32>, vector<16x16xf32> -> vector<16x16xf32>
    %62 = arith.addf %57, %61 : vector<16x16xf32>
    %c2_66 = arith.constant 2 : index
    %c0_67 = arith.constant 0 : index
    %c0_68 = arith.constant 0 : index
    %63 = vector.load %arg6[%c2_66, %c0_67, %c0_68] : memref<3x16x8xf32, #tpu.memory_space<vmem>>, vector<1x16x8xf32>
    %64 = vector.shape_cast %63 : vector<1x16x8xf32> to vector<16x8xf32>
    %c0_69 = arith.constant 0 : index
    %c2_70 = arith.constant 2 : index
    %65 = vector.load %arg13[%c0_69, %c2_70] : memref<16x18xf32, #tpu.memory_space<vmem>>, vector<8x16xf32>
    %cst_71 = arith.constant dense<0.000000e+00> : vector<16x16xf32>
    %66 = tpu.matmul %64, %65, %cst_71 {dimension_numbers = #tpu.dot_dimension_numbers<[1], [0], [0], [1], [0, 0, 1, 1], [], []>} : vector<16x8xf32>, vector<8x16xf32>, vector<16x16xf32> -> vector<16x16xf32>
    %67 = arith.addf %62, %66 : vector<16x16xf32>
    %c0_72 = arith.constant 0 : index
    %c0_73 = arith.constant 0 : index
    %68 = vector.load %arg7[%c0_72, %c0_73] : memref<16x1xf32, #tpu.memory_space<vmem>>, vector<16x1xf32>
    %69 = vector.broadcast %68 : vector<16x1xf32> to vector<16x16xf32>
    %70 = arith.addf %67, %69 : vector<16x16xf32>
    %cst_74 = arith.constant 0.000000e+00 : f32
    %71 = vector.broadcast %cst_74 : f32 to vector<16x16xf32>
    %72 = arith.maximumf %70, %71 : vector<16x16xf32>
    %c0_75 = arith.constant 0 : index
    %c2_76 = arith.constant 2 : index
    %73 = vector.load %arg13[%c0_75, %c2_76] : memref<16x18xf32, #tpu.memory_space<vmem>>, vector<16x16xf32>
    tpu.vector_store %arg13[%c0_75, %c2_76], %72 {strides = array<i32>} : memref<16x18xf32, #tpu.memory_space<vmem>>, vector<16x16xf32>,
    %cst_77 = arith.constant 0.000000e+00 : f32
    %74 = vector.broadcast %cst_77 : f32 to vector<16x16xf32>
    %c0_78 = arith.constant 0 : index
    %c0_79 = arith.constant 0 : index
    %c0_80 = arith.constant 0 : index
    %75 = vector.load %arg8[%c0_78, %c0_79, %c0_80] : memref<3x16x16xf32, #tpu.memory_space<vmem>>, vector<1x16x16xf32>
    %76 = vector.shape_cast %75 : vector<1x16x16xf32> to vector<16x16xf32>
    %c0_81 = arith.constant 0 : index
    %c0_82 = arith.constant 0 : index
    %77 = vector.load %arg13[%c0_81, %c0_82] : memref<16x18xf32, #tpu.memory_space<vmem>>, vector<16x16xf32>
    %cst_83 = arith.constant dense<0.000000e+00> : vector<16x16xf32>
    %78 = tpu.matmul %76, %77, %cst_83 {dimension_numbers = #tpu.dot_dimension_numbers<[1], [0], [0], [1], [0, 0, 1, 1], [], []>} : vector<16x16xf32>, vector<16x16xf32>, vector<16x16xf32> -> vector<16x16xf32>
    %79 = arith.addf %74, %78 : vector<16x16xf32>
    %c1_84 = arith.constant 1 : index
    %c0_85 = arith.constant 0 : index
    %c0_86 = arith.constant 0 : index
    %80 = vector.load %arg8[%c1_84, %c0_85, %c0_86] : memref<3x16x16xf32, #tpu.memory_space<vmem>>, vector<1x16x16xf32>
    %81 = vector.shape_cast %80 : vector<1x16x16xf32> to vector<16x16xf32>
    %c0_87 = arith.constant 0 : index
    %c1_88 = arith.constant 1 : index
    %82 = vector.load %arg13[%c0_87, %c1_88] : memref<16x18xf32, #tpu.memory_space<vmem>>, vector<16x16xf32>
    %cst_89 = arith.constant dense<0.000000e+00> : vector<16x16xf32>
    %83 = tpu.matmul %81, %82, %cst_89 {dimension_numbers = #tpu.dot_dimension_numbers<[1], [0], [0], [1], [0, 0, 1, 1], [], []>} : vector<16x16xf32>, vector<16x16xf32>, vector<16x16xf32> -> vector<16x16xf32>
    %84 = arith.addf %79, %83 : vector<16x16xf32>
    %c2_90 = arith.constant 2 : index
    %c0_91 = arith.constant 0 : index
    %c0_92 = arith.constant 0 : index
    %85 = vector.load %arg8[%c2_90, %c0_91, %c0_92] : memref<3x16x16xf32, #tpu.memory_space<vmem>>, vector<1x16x16xf32>
    %86 = vector.shape_cast %85 : vector<1x16x16xf32> to vector<16x16xf32>
    %c0_93 = arith.constant 0 : index
    %c2_94 = arith.constant 2 : index
    %87 = vector.load %arg13[%c0_93, %c2_94] : memref<16x18xf32, #tpu.memory_space<vmem>>, vector<16x16xf32>
    %cst_95 = arith.constant dense<0.000000e+00> : vector<16x16xf32>
    %88 = tpu.matmul %86, %87, %cst_95 {dimension_numbers = #tpu.dot_dimension_numbers<[1], [0], [0], [1], [0, 0, 1, 1], [], []>} : vector<16x16xf32>, vector<16x16xf32>, vector<16x16xf32> -> vector<16x16xf32>
    %89 = arith.addf %84, %88 : vector<16x16xf32>
    %c0_96 = arith.constant 0 : index
    %c0_97 = arith.constant 0 : index
    %90 = vector.load %arg9[%c0_96, %c0_97] : memref<16x1xf32, #tpu.memory_space<vmem>>, vector<16x1xf32>
    %91 = vector.broadcast %90 : vector<16x1xf32> to vector<16x16xf32>
    %92 = arith.addf %89, %91 : vector<16x16xf32>
    %cst_98 = arith.constant 0.000000e+00 : f32
    %93 = vector.broadcast %cst_98 : f32 to vector<16x16xf32>
    %94 = arith.maximumf %92, %93 : vector<16x16xf32>
    %c0_99 = arith.constant 0 : index
    %c0_100 = arith.constant 0 : index
    %95 = vector.load %arg10[%c0_99, %c0_100] : memref<16x8xf32, #tpu.memory_space<vmem>>, vector<16x8xf32>
    %cst_101 = arith.constant dense<0.000000e+00> : vector<16x16xf32>
    %96 = tpu.matmul %95, %50, %cst_101 {dimension_numbers = #tpu.dot_dimension_numbers<[1], [0], [0], [1], [0, 0, 1, 1], [], []>} : vector<16x8xf32>, vector<8x16xf32>, vector<16x16xf32> -> vector<16x16xf32>
    %c0_102 = arith.constant 0 : index
    %c0_103 = arith.constant 0 : index
    %97 = vector.load %arg11[%c0_102, %c0_103] : memref<16x1xf32, #tpu.memory_space<vmem>>, vector<16x1xf32>
    %98 = vector.broadcast %97 : vector<16x1xf32> to vector<16x16xf32>
    %99 = arith.addf %96, %98 : vector<16x16xf32>
    %100 = arith.addf %94, %99 : vector<16x16xf32>
    %cst_104 = arith.constant 0.000000e+00 : f32
    %101 = vector.broadcast %cst_104 : f32 to vector<16x16xf32>
    %102 = arith.maximumf %100, %101 : vector<16x16xf32>
    %c0_105 = arith.constant 0 : index
    %c0_106 = arith.constant 0 : index
    %c0_107 = arith.constant 0 : index
    %103 = vector.load %arg12[%c0_105, %c0_106, %c0_107] : memref<1x16x16xf32, #tpu.memory_space<vmem>>, vector<1x16x16xf32>
    %104 = vector.shape_cast %103 : vector<1x16x16xf32> to vector<16x16xf32>
    %105 = vector.shape_cast %102 : vector<16x16xf32> to vector<1x16x16xf32>
    tpu.vector_store %arg12[%c0_105, %c0_106, %c0_107], %105 {strides = array<i32>} : memref<1x16x16xf32, #tpu.memory_space<vmem>>, vector<1x16x16xf32>,
    return
  }
  func.func @transform_0(%arg0: i32) -> (i32, i32, i32) {
    %c0_i32 = arith.constant 0 : i32
    %c0_i32_0 = arith.constant 0 : i32
    %c0_i32_1 = arith.constant 0 : i32
    return %arg0, %c0_i32, %c0_i32_0 : i32, i32, i32
  }
  func.func @transform_1(%arg0: i32) -> (i32, i32, i32) {
    %c0_i32 = arith.constant 0 : i32
    %c0_i32_0 = arith.constant 0 : i32
    %c0_i32_1 = arith.constant 0 : i32
    %c0_i32_2 = arith.constant 0 : i32
    return %c0_i32, %c0_i32_0, %c0_i32_1 : i32, i32, i32
  }
  func.func @transform_2(%arg0: i32) -> (i32, i32) {
    %c0_i32 = arith.constant 0 : i32
    %c0_i32_0 = arith.constant 0 : i32
    %c0_i32_1 = arith.constant 0 : i32
    return %c0_i32, %c0_i32_0 : i32, i32
  }
  func.func @transform_3(%arg0: i32) -> (i32, i32, i32) {
    %c0_i32 = arith.constant 0 : i32
    %c0_i32_0 = arith.constant 0 : i32
    %c0_i32_1 = arith.constant 0 : i32
    %c0_i32_2 = arith.constant 0 : i32
    return %c0_i32, %c0_i32_0, %c0_i32_1 : i32, i32, i32
  }
  func.func @transform_4(%arg0: i32) -> (i32, i32) {
    %c0_i32 = arith.constant 0 : i32
    %c0_i32_0 = arith.constant 0 : i32
    %c0_i32_1 = arith.constant 0 : i32
    return %c0_i32, %c0_i32_0 : i32, i32
  }
  func.func @transform_5(%arg0: i32) -> (i32, i32, i32) {
    %c0_i32 = arith.constant 0 : i32
    %c0_i32_0 = arith.constant 0 : i32
    %c0_i32_1 = arith.constant 0 : i32
    %c0_i32_2 = arith.constant 0 : i32
    return %c0_i32, %c0_i32_0, %c0_i32_1 : i32, i32, i32
  }
  func.func @transform_6(%arg0: i32) -> (i32, i32) {
    %c0_i32 = arith.constant 0 : i32
    %c0_i32_0 = arith.constant 0 : i32
    %c0_i32_1 = arith.constant 0 : i32
    return %c0_i32, %c0_i32_0 : i32, i32
  }
  func.func @transform_7(%arg0: i32) -> (i32, i32, i32) {
    %c0_i32 = arith.constant 0 : i32
    %c0_i32_0 = arith.constant 0 : i32
    %c0_i32_1 = arith.constant 0 : i32
    %c0_i32_2 = arith.constant 0 : i32
    return %c0_i32, %c0_i32_0, %c0_i32_1 : i32, i32, i32
  }
  func.func @transform_8(%arg0: i32) -> (i32, i32) {
    %c0_i32 = arith.constant 0 : i32
    %c0_i32_0 = arith.constant 0 : i32
    %c0_i32_1 = arith.constant 0 : i32
    return %c0_i32, %c0_i32_0 : i32, i32
  }
  func.func @transform_9(%arg0: i32) -> (i32, i32) {
    %c0_i32 = arith.constant 0 : i32
    %c0_i32_0 = arith.constant 0 : i32
    %c0_i32_1 = arith.constant 0 : i32
    return %c0_i32, %c0_i32_0 : i32, i32
  }
  func.func @transform_10(%arg0: i32) -> (i32, i32) {
    %c0_i32 = arith.constant 0 : i32
    %c0_i32_0 = arith.constant 0 : i32
    %c0_i32_1 = arith.constant 0 : i32
    return %c0_i32, %c0_i32_0 : i32, i32
  }
  func.func @transform_11(%arg0: i32) -> (i32, i32, i32) {
    %c0_i32 = arith.constant 0 : i32
    %c0_i32_0 = arith.constant 0 : i32
    %c0_i32_1 = arith.constant 0 : i32
    return %arg0, %c0_i32, %c0_i32_0 : i32, i32, i32
  }
}

</mosaic_0001>

<llo_original>
// kernel: tpu_custom_call.1
$region0: #{tpu_custom_call.1}
  #allocation0 [shape = 'u32[]', space=smem, size = 0x4, offset = 0x4, fixed_abs, tag = 'smem constant byte address 0x4 - core index']
  #allocation1 [shape = 'u32[144,128]{1,0:T(1,128)}', space=vmem, size = 0x12000, scoped, tag = 'internal scratch']
  #allocation2 [shape = 'f32[16,18]{1,0:T(8,128)}', space=vmem, size = 0x2000, scoped, tag = 'scratch operand']
  %s0 = inlined_call_operand.vmem [shape: f32[2,8,16], index: 0, kind: input, shape index: {}]
  %s1 = inlined_call_operand.vmem [shape: f32[3,8,8], index: 1, kind: input, shape index: {}]
  %s2 = inlined_call_operand.vmem [shape: f32[8,1], index: 2, kind: input, shape index: {}]
  %s3 = inlined_call_operand.vmem [shape: f32[3,8,8], index: 3, kind: input, shape index: {}]
  %s4 = inlined_call_operand.vmem [shape: f32[8,1], index: 4, kind: input, shape index: {}]
  %s5 = inlined_call_operand.vmem [shape: f32[3,16,8], index: 5, kind: input, shape index: {}]
  %s6 = inlined_call_operand.vmem [shape: f32[16,1], index: 6, kind: input, shape index: {}]
  %s7 = inlined_call_operand.vmem [shape: f32[3,16,16], index: 7, kind: input, shape index: {}]
  %s8 = inlined_call_operand.vmem [shape: f32[16,1], index: 8, kind: input, shape index: {}]
  %s9 = inlined_call_operand.vmem [shape: f32[16,8], index: 9, kind: input, shape index: {}]
  %s10 = inlined_call_operand.vmem [shape: f32[16,1], index: 10, kind: input, shape index: {}]
  %s11 = inlined_call_operand.hbm [shape: f32[2,16,16], index: 11, kind: output, shape index: {}]
  %s12 = sld [smem:[#allocation0]]
  $region77: #{tpu_custom_call.1} parent=0
    _
  %s14 = ssub.s32 1, %s12
  %s15 = scalar_select 0, %s14, %s12
  $region1: #{tpu_custom_call.1} parent=0
    #allocation3 [shape = 'u8[16384]{0}', space=vmem, size = 0x4000, scoped, tag = 'output window, operand 0']
    #allocation4 [shape = 's32[2]{0}', space=sflag, size = 0x8, scoped, tag = 'scoped memory for tpu_custom_call.1']
    %16 = vsyncpa [#allocation4], 0
    %s17 = scalar_lea.sflag [#allocation4], 1
    %18 = vsyncpa %s17, 0
    loop: start=0, step=1, limit=4
    $region2: #{tpu_custom_call.1} parent=1 // loop_pre_header
      _
    $region3: #{tpu_custom_call.1} parent=1 // loop_header
      %s20 = sphi 0, %s24
      %p21 = scmp.ge.s32.totalorder %s20, 4
      %s30 = sphi 0, %s32
      %s33 = sphi 0, %s30
      %s34 = sphi 0, %s33
      %s50 = sphi 0, %s34
      %s54 = sphi 0, %s54
      %s56 = sphi 0, %s54
      %s57 = sphi 0, %s56
      %s71 = sphi 0, %s57
      %s75 = sphi 0, %s75
      %s77 = sphi 0, %s75
      %s78 = sphi 0, %s77
      %s92 = sphi 0, %s78
      %s96 = sphi 0, %s96
      %s98 = sphi 0, %s96
      %s99 = sphi 0, %s98
      %s113 = sphi 0, %s99
      %s117 = sphi 0, %s117
      %s119 = sphi 0, %s117
      %s120 = sphi 0, %s119
      %s134 = sphi 0, %s120
      %s138 = sphi 0, %s138
      %s140 = sphi 0, %s138
      %s141 = sphi 0, %s140
      %s155 = sphi 0, %s141
      %s159 = sphi 0, %s159
      %s161 = sphi 0, %s159
      %s162 = sphi 0, %s161
      %s176 = sphi 0, %s162
      %s180 = sphi 0, %s180
      %s182 = sphi 0, %s180
      %s183 = sphi 0, %s182
      %s197 = sphi 0, %s183
      %s201 = sphi 0, %s201
      %s203 = sphi 0, %s201
      %s204 = sphi 0, %s203
      %s218 = sphi 0, %s204
      %s222 = sphi 0, %s222
      %s224 = sphi 0, %s222
      %s225 = sphi 0, %s224
      %s239 = sphi 0, %s225
      %s243 = sphi 0, %s243
      %s245 = sphi 0, %s243
      %s246 = sphi 0, %s245
      %s260 = sphi 0, %s246
      %s266 = sphi 0, %s268
      %s269 = sphi 0, %s266
      %s270 = sphi 0, %s269
      %s286 = sphi 0, %s270
    $region4: #{tpu_custom_call.1} parent=1 // loop_header_branch
      %23 = sbr.rel (%p21) target = $region8
    $region5: #{tpu_custom_call.1} parent=1 // loop_body
      %s25 = ssub.s32 %s20, 1
      %s26 = ssub.s32 %s20, 2
      %s27 = sadd.s32 %s20, 1
      %s28 = ssub.s32 %s20, %s27
      %p29 = scmp.eq.s32.totalorder %s28, 0
      %s31 = sadd.s32 %s30, 1
      %s32 = scalar_select %p29, %s30, %s31
      %p35 = pneg %p29
      %p36 = scmp.eq.s32.totalorder %s20, 1
      %p37 = por %p35, %p36
      %p38 = scmp.ne.s32.totalorder %s30, %s33
      %p39 = scmp.eq.s32.totalorder %s20, 0
      %p40 = por %p38, %p39
      %p41 = scmp.ne.s32.totalorder %s30, %s33
      %p42 = scmp.eq.s32.totalorder %s25, 1
      %p43 = por %p41, %p42
      %p44 = scmp.ne.s32.totalorder %s33, %s34
      %p45 = scmp.eq.s32.totalorder %s25, 0
      %p46 = por %p44, %p45
      %p47 = scmp.ne.s32.totalorder %s33, %s34
      %p48 = scmp.eq.s32.totalorder %s26, 1
      %p49 = por %p47, %p48
      %p51 = scmp.ne.s32.totalorder %s34, %s50
      %p52 = scmp.eq.s32.totalorder %s26, 0
      %p53 = por %p51, %p52
      %s55 = sadd.s32 %s54, 1
      %p58 = scmp.eq.s32.totalorder %s20, 1
      %p59 = scmp.ne.s32.totalorder %s54, %s56
      %p60 = scmp.eq.s32.totalorder %s20, 0
      %p61 = por %p59, %p60
      %p62 = scmp.ne.s32.totalorder %s54, %s56
      %p63 = scmp.eq.s32.totalorder %s25, 1
      %p64 = por %p62, %p63
      %p65 = scmp.ne.s32.totalorder %s56, %s57
      %p66 = scmp.eq.s32.totalorder %s25, 0
      %p67 = por %p65, %p66
      %p68 = scmp.ne.s32.totalorder %s56, %s57
      %p69 = scmp.eq.s32.totalorder %s26, 1
      %p70 = por %p68, %p69
      %p72 = scmp.ne.s32.totalorder %s57, %s71
      %p73 = scmp.eq.s32.totalorder %s26, 0
      %p74 = por %p72, %p73
      %s76 = sadd.s32 %s75, 1
      %p79 = scmp.eq.s32.totalorder %s20, 1
      %p80 = scmp.ne.s32.totalorder %s75, %s77
      %p81 = scmp.eq.s32.totalorder %s20, 0
      %p82 = por %p80, %p81
      %p83 = scmp.ne.s32.totalorder %s75, %s77
      %p84 = scmp.eq.s32.totalorder %s25, 1
      %p85 = por %p83, %p84
      %p86 = scmp.ne.s32.totalorder %s77, %s78
      %p87 = scmp.eq.s32.totalorder %s25, 0
      %p88 = por %p86, %p87
      %p89 = scmp.ne.s32.totalorder %s77, %s78
      %p90 = scmp.eq.s32.totalorder %s26, 1
      %p91 = por %p89, %p90
      %p93 = scmp.ne.s32.totalorder %s78, %s92
      %p94 = scmp.eq.s32.totalorder %s26, 0
      %p95 = por %p93, %p94
      %s97 = sadd.s32 %s96, 1
      %p100 = scmp.eq.s32.totalorder %s20, 1
      %p101 = scmp.ne.s32.totalorder %s96, %s98
      %p102 = scmp.eq.s32.totalorder %s20, 0
      %p103 = por %p101, %p102
      %p104 = scmp.ne.s32.totalorder %s96, %s98
      %p105 = scmp.eq.s32.totalorder %s25, 1
      %p106 = por %p104, %p105
      %p107 = scmp.ne.s32.totalorder %s98, %s99
      %p108 = scmp.eq.s32.totalorder %s25, 0
      %p109 = por %p107, %p108
      %p110 = scmp.ne.s32.totalorder %s98, %s99
      %p111 = scmp.eq.s32.totalorder %s26, 1
      %p112 = por %p110, %p111
      %p114 = scmp.ne.s32.totalorder %s99, %s113
      %p115 = scmp.eq.s32.totalorder %s26, 0
      %p116 = por %p114, %p115
      %s118 = sadd.s32 %s117, 1
      %p121 = scmp.eq.s32.totalorder %s20, 1
      %p122 = scmp.ne.s32.totalorder %s117, %s119
      %p123 = scmp.eq.s32.totalorder %s20, 0
      %p124 = por %p122, %p123
      %p125 = scmp.ne.s32.totalorder %s117, %s119
      %p126 = scmp.eq.s32.totalorder %s25, 1
      %p127 = por %p125, %p126
      %p128 = scmp.ne.s32.totalorder %s119, %s120
      %p129 = scmp.eq.s32.totalorder %s25, 0
      %p130 = por %p128, %p129
      %p131 = scmp.ne.s32.totalorder %s119, %s120
      %p132 = scmp.eq.s32.totalorder %s26, 1
      %p133 = por %p131, %p132
      %p135 = scmp.ne.s32.totalorder %s120, %s134
      %p136 = scmp.eq.s32.totalorder %s26, 0
      %p137 = por %p135, %p136
      %s139 = sadd.s32 %s138, 1
      %p142 = scmp.eq.s32.totalorder %s20, 1
      %p143 = scmp.ne.s32.totalorder %s138, %s140
      %p144 = scmp.eq.s32.totalorder %s20, 0
      %p145 = por %p143, %p144
      %p146 = scmp.ne.s32.totalorder %s138, %s140
      %p147 = scmp.eq.s32.totalorder %s25, 1
      %p148 = por %p146, %p147
      %p149 = scmp.ne.s32.totalorder %s140, %s141
      %p150 = scmp.eq.s32.totalorder %s25, 0
      %p151 = por %p149, %p150
      %p152 = scmp.ne.s32.totalorder %s140, %s141
      %p153 = scmp.eq.s32.totalorder %s26, 1
      %p154 = por %p152, %p153
      %p156 = scmp.ne.s32.totalorder %s141, %s155
      %p157 = scmp.eq.s32.totalorder %s26, 0
      %p158 = por %p156, %p157
      %s160 = sadd.s32 %s159, 1
      %p163 = scmp.eq.s32.totalorder %s20, 1
      %p164 = scmp.ne.s32.totalorder %s159, %s161
      %p165 = scmp.eq.s32.totalorder %s20, 0
      %p166 = por %p164, %p165
      %p167 = scmp.ne.s32.totalorder %s159, %s161
      %p168 = scmp.eq.s32.totalorder %s25, 1
      %p169 = por %p167, %p168
      %p170 = scmp.ne.s32.totalorder %s161, %s162
      %p171 = scmp.eq.s32.totalorder %s25, 0
      %p172 = por %p170, %p171
      %p173 = scmp.ne.s32.totalorder %s161, %s162
      %p174 = scmp.eq.s32.totalorder %s26, 1
      %p175 = por %p173, %p174
      %p177 = scmp.ne.s32.totalorder %s162, %s176
      %p178 = scmp.eq.s32.totalorder %s26, 0
      %p179 = por %p177, %p178
      %s181 = sadd.s32 %s180, 1
      %p184 = scmp.eq.s32.totalorder %s20, 1
      %p185 = scmp.ne.s32.totalorder %s180, %s182
      %p186 = scmp.eq.s32.totalorder %s20, 0
      %p187 = por %p185, %p186
      %p188 = scmp.ne.s32.totalorder %s180, %s182
      %p189 = scmp.eq.s32.totalorder %s25, 1
      %p190 = por %p188, %p189
      %p191 = scmp.ne.s32.totalorder %s182, %s183
      %p192 = scmp.eq.s32.totalorder %s25, 0
      %p193 = por %p191, %p192
      %p194 = scmp.ne.s32.totalorder %s182, %s183
      %p195 = scmp.eq.s32.totalorder %s26, 1
      %p196 = por %p194, %p195
      %p198 = scmp.ne.s32.totalorder %s183, %s197
      %p199 = scmp.eq.s32.totalorder %s26, 0
      %p200 = por %p198, %p199
      %s202 = sadd.s32 %s201, 1
      %p205 = scmp.eq.s32.totalorder %s20, 1
      %p206 = scmp.ne.s32.totalorder %s201, %s203
      %p207 = scmp.eq.s32.totalorder %s20, 0
      %p208 = por %p206, %p207
      %p209 = scmp.ne.s32.totalorder %s201, %s203
      %p210 = scmp.eq.s32.totalorder %s25, 1
      %p211 = por %p209, %p210
      %p212 = scmp.ne.s32.totalorder %s203, %s204
      %p213 = scmp.eq.s32.totalorder %s25, 0
      %p214 = por %p212, %p213
      %p215 = scmp.ne.s32.totalorder %s203, %s204
      %p216 = scmp.eq.s32.totalorder %s26, 1
      %p217 = por %p215, %p216
      %p219 = scmp.ne.s32.totalorder %s204, %s218
      %p220 = scmp.eq.s32.totalorder %s26, 0
      %p221 = por %p219, %p220
      %s223 = sadd.s32 %s222, 1
      %p226 = scmp.eq.s32.totalorder %s20, 1
      %p227 = scmp.ne.s32.totalorder %s222, %s224
      %p228 = scmp.eq.s32.totalorder %s20, 0
      %p229 = por %p227, %p228
      %p230 = scmp.ne.s32.totalorder %s222, %s224
      %p231 = scmp.eq.s32.totalorder %s25, 1
      %p232 = por %p230, %p231
      %p233 = scmp.ne.s32.totalorder %s224, %s225
      %p234 = scmp.eq.s32.totalorder %s25, 0
      %p235 = por %p233, %p234
      %p236 = scmp.ne.s32.totalorder %s224, %s225
      %p237 = scmp.eq.s32.totalorder %s26, 1
      %p238 = por %p236, %p237
      %p240 = scmp.ne.s32.totalorder %s225, %s239
      %p241 = scmp.eq.s32.totalorder %s26, 0
      %p242 = por %p240, %p241
      %s244 = sadd.s32 %s243, 1
      %p247 = scmp.eq.s32.totalorder %s20, 1
      %p248 = scmp.ne.s32.totalorder %s243, %s245
      %p249 = scmp.eq.s32.totalorder %s20, 0
      %p250 = por %p248, %p249
      %p251 = scmp.ne.s32.totalorder %s243, %s245
      %p252 = scmp.eq.s32.totalorder %s25, 1
      %p253 = por %p251, %p252
      %p254 = scmp.ne.s32.totalorder %s245, %s246
      %p255 = scmp.eq.s32.totalorder %s25, 0
      %p256 = por %p254, %p255
      %p257 = scmp.ne.s32.totalorder %s245, %s246
      %p258 = scmp.eq.s32.totalorder %s26, 1
      %p259 = por %p257, %p258
      %p261 = scmp.ne.s32.totalorder %s246, %s260
      %p262 = scmp.eq.s32.totalorder %s26, 0
      %p263 = por %p261, %p262
      %s264 = ssub.s32 %s20, %s27
      %p265 = scmp.eq.s32.totalorder %s264, 0
      %s267 = sadd.s32 %s266, 1
      %s268 = scalar_select %p265, %s266, %s267
      %p271 = pneg %p265
      %p272 = scmp.eq.s32.totalorder %s20, 1
      %p273 = por %p271, %p272
      %p274 = scmp.ne.s32.totalorder %s266, %s269
      %p275 = scmp.eq.s32.totalorder %s20, 0
      %p276 = por %p274, %p275
      %p277 = scmp.ne.s32.totalorder %s266, %s269
      %p278 = scmp.eq.s32.totalorder %s25, 1
      %p279 = por %p277, %p278
      %p280 = scmp.ne.s32.totalorder %s269, %s270
      %p281 = scmp.eq.s32.totalorder %s25, 0
      %p282 = por %p280, %p281
      %p283 = scmp.ne.s32.totalorder %s269, %s270
      %p284 = scmp.eq.s32.totalorder %s26, 1
      %p285 = por %p283, %p284
      %p287 = scmp.ne.s32.totalorder %s270, %s286
      %p288 = scmp.eq.s32.totalorder %s26, 0
      %p289 = por %p287, %p288
      %p290 = scmp.le.s32.totalorder 1, %s20
      %p291 = scmp.lt.s32.totalorder %s20, 3
      %p292 = pnand %p290, %p291
      %p293 = pneg %p292
      // Predicated region
      $region9: #{tpu_custom_call.1} parent=5 // pred_check
        _
      $region10: #{tpu_custom_call.1} parent=5 // pred_check_branch
        %295 = sbr.rel (%p292) target = $region12
      $region11: #{tpu_custom_call.1} parent=5 // pred_region
        %s296 = ssub.s32 %s20, 1
        // Predicated region
        $region13: #{tpu_custom_call.1} parent=11 // pred_check
          %p297 = pneg %p67
        $region14: #{tpu_custom_call.1} parent=11 // pred_check_branch
          %299 = sbr.rel (%p297) target = $region16
        $region15: #{tpu_custom_call.1} parent=11 // pred_region
          _
        $region16: #{tpu_custom_call.1} parent=11 // pred_fallthru
          _
        // Predicated region
        $region17: #{tpu_custom_call.1} parent=11 // pred_check
          %p300 = pneg %p88
        $region18: #{tpu_custom_call.1} parent=11 // pred_check_branch
          %302 = sbr.rel (%p300) target = $region20
        $region19: #{tpu_custom_call.1} parent=11 // pred_region
          _
        $region20: #{tpu_custom_call.1} parent=11 // pred_fallthru
          _
        // Predicated region
        $region21: #{tpu_custom_call.1} parent=11 // pred_check
          %p303 = pneg %p109
        $region22: #{tpu_custom_call.1} parent=11 // pred_check_branch
          %305 = sbr.rel (%p303) target = $region24
        $region23: #{tpu_custom_call.1} parent=11 // pred_region
          _
        $region24: #{tpu_custom_call.1} parent=11 // pred_fallthru
          _
        // Predicated region
        $region25: #{tpu_custom_call.1} parent=11 // pred_check
          %p306 = pneg %p130
        $region26: #{tpu_custom_call.1} parent=11 // pred_check_branch
          %308 = sbr.rel (%p306) target = $region28
        $region27: #{tpu_custom_call.1} parent=11 // pred_region
          _
        $region28: #{tpu_custom_call.1} parent=11 // pred_fallthru
          _
        // Predicated region
        $region29: #{tpu_custom_call.1} parent=11 // pred_check
          %p309 = pneg %p151
        $region30: #{tpu_custom_call.1} parent=11 // pred_check_branch
          %311 = sbr.rel (%p309) target = $region32
        $region31: #{tpu_custom_call.1} parent=11 // pred_region
          _
        $region32: #{tpu_custom_call.1} parent=11 // pred_fallthru
          _
        // Predicated region
        $region33: #{tpu_custom_call.1} parent=11 // pred_check
          %p312 = pneg %p172
        $region34: #{tpu_custom_call.1} parent=11 // pred_check_branch
          %314 = sbr.rel (%p312) target = $region36
        $region35: #{tpu_custom_call.1} parent=11 // pred_region
          _
        $region36: #{tpu_custom_call.1} parent=11 // pred_fallthru
          _
        // Predicated region
        $region37: #{tpu_custom_call.1} parent=11 // pred_check
          %p315 = pneg %p193
        $region38: #{tpu_custom_call.1} parent=11 // pred_check_branch
          %317 = sbr.rel (%p315) target = $region40
        $region39: #{tpu_custom_call.1} parent=11 // pred_region
          _
        $region40: #{tpu_custom_call.1} parent=11 // pred_fallthru
          _
        // Predicated region
        $region41: #{tpu_custom_call.1} parent=11 // pred_check
          %p318 = pneg %p214
        $region42: #{tpu_custom_call.1} parent=11 // pred_check_branch
          %320 = sbr.rel (%p318) target = $region44
        $region43: #{tpu_custom_call.1} parent=11 // pred_region
          _
        $region44: #{tpu_custom_call.1} parent=11 // pred_fallthru
          _
        // Predicated region
        $region45: #{tpu_custom_call.1} parent=11 // pred_check
          %p321 = pneg %p235
        $region46: #{tpu_custom_call.1} parent=11 // pred_check_branch
          %323 = sbr.rel (%p321) target = $region48
        $region47: #{tpu_custom_call.1} parent=11 // pred_region
          _
        $region48: #{tpu_custom_call.1} parent=11 // pred_fallthru
          _
        // Predicated region
        $region49: #{tpu_custom_call.1} parent=11 // pred_check
          %p324 = pneg %p256
        $region50: #{tpu_custom_call.1} parent=11 // pred_check_branch
          %326 = sbr.rel (%p324) target = $region52
        $region51: #{tpu_custom_call.1} parent=11 // pred_region
          _
        $region52: #{tpu_custom_call.1} parent=11 // pred_fallthru
          _
      $region12: #{tpu_custom_call.1} parent=5 // pred_fallthru
        _
      %p327 = scmp.lt.s32.totalorder %s20, 2
      // Predicated region
      $region53: #{tpu_custom_call.1} parent=5 // pred_check
        %p328 = pneg %p327
      $region54: #{tpu_custom_call.1} parent=5 // pred_check_branch
        %330 = sbr.rel (%p328) target = $region56
      $region55: #{tpu_custom_call.1} parent=5 // pred_region
        // Predicated region
        $region57: #{tpu_custom_call.1} parent=55 // pred_check
          %p331 = pneg %p40
        $region58: #{tpu_custom_call.1} parent=55 // pred_check_branch
          %333 = sbr.rel (%p331) target = $region60
        $region59: #{tpu_custom_call.1} parent=55 // pred_region
          %p334 = scmp.lt.s32.totalorder %s20, 1
          %s335 = scalar_select %p334, %s20, 1
          %s336 = smul.addr %s335, 8
          %s337 = scalar_lea.vmem %s0, %s336
        $region60: #{tpu_custom_call.1} parent=55 // pred_fallthru
          _
      $region56: #{tpu_custom_call.1} parent=5 // pred_fallthru
        _
      %p338 = scmp.le.s32.totalorder 1, %s20
      %p339 = scmp.lt.s32.totalorder %s20, 3
      %p340 = pnand %p338, %p339
      %p341 = pneg %p340
      // Predicated region
      $region61: #{tpu_custom_call.1} parent=5 // pred_check
        _
      $region62: #{tpu_custom_call.1} parent=5 // pred_check_branch
        %343 = sbr.rel (%p340) target = $region64
      $region63: #{tpu_custom_call.1} parent=5 // pred_region
        %s344 = ssub.s32 %s20, 1
        %p345 = scmp.lt.s32.totalorder %s25, 1
        %s346 = scalar_select %p345, %s25, 1
        %s347 = smul.addr %s346, 8
        %s348 = scalar_lea.vmem %s0, %s347
        %p349 = pneg %p46
        %p350 = pneg %p43
        %p351 = pneg %p67
        %p352 = pneg %p64
        %p353 = pneg %p88
        %p354 = pneg %p85
        %p355 = pneg %p109
        %p356 = pneg %p106
        %p357 = pneg %p130
        %p358 = pneg %p127
        %p359 = pneg %p151
        %p360 = pneg %p148
        %p361 = pneg %p172
        %p362 = pneg %p169
        %p363 = pneg %p193
        %p364 = pneg %p190
        %p365 = pneg %p214
        %p366 = pneg %p211
        %p367 = pneg %p235
        %p368 = pneg %p232
        %p369 = pneg %p256
        %p370 = pneg %p253
        %p371 = pneg %p282
        %p372 = pneg %p279
        %s373 = sand.u32 %s269, 1
        %s374 = scalar_lea.sflag [#allocation4], %s373
        %s375 = sand.u32 %s269, 1
        %s376 = smul.addr %s375, 16
        %s377 = scalar_lea.vmem [#allocation3], %s376
        %p378 = scmp.lt.s32.totalorder %s25, 1
        %s379 = scalar_select %p378, %s25, 1
        %s380 = smul.addr %s379, 8
        %s381 = scalar_lea.vmem %s0, %s380
        %vm382 = vcmask 15360
        %383 = vst.msk [vmem:[#allocation2] sm:$0xff] %vm382, 0.0
        %384 = vst.msk [vmem:[#allocation2 + $0x8] sm:$0xff] %vm382, 0.0
        %v385 = vld [vmem:[%s381] sm:$0xff]
        %387 = vrot.lane.b32.xlu0 %v385, 2
        %v388 = vpop.permute.xlu0 %387
        %vm390 = vcmask 146448
        %391 = vst.msk [vmem:[#allocation2] sm:$0xff] %vm390, %v388
        %v392 = vld [vmem:[%s1] sm:$0xff]
        %v393 = vld [vmem:[#allocation2] sm:$0xff]
        %s394 = scalar_lea.vmem %s1, 8
        %v395 = vld [vmem:[%s394] sm:$0xff]
        %397 = vrot.lane.b32.xlu0 %v393, 127
        %v398 = vpop.permute.xlu0 %397
        %vm400 = vcmask 64512
        %v402 = vsel %vm400, %v395, 0
        %404 = vmatprep.subr.mxu0 0.0
        %405 = vmatpush1.msra.mxu0 %v398
        %406 = vmatprep.subr.mxu0 0.0
        %407 = vmatpush1.msra.mxu0 0.0
        %408 = vmatprep.subr.mxu0 0.0
        %409 = vmatpush1.msra.mxu0 0.0
        %410 = vmatprep.subr.mxu0 0.0
        %411 = vmatpush1.msra.mxu0 0.0
        %412 = vmatprep.subr.mxu0 0.0
        %413 = vmatpush1.msra.mxu0 0.0
        %414 = vmatprep.subr.mxu0 0.0
        %415 = vmatpush1.msra.mxu0 0.0
        %416 = vmatprep.subr.mxu0 0.0
        %417 = vmatpush1.msra.mxu0 0.0
        %418 = vmatprep.subr.mxu0 0.0
        %419 = vmatpush1.msra.mxu0 0.0
        %420 = vmatprep.subr.mxu0 0.0
        %421 = vmatpush1.msra.mxu0 0.0
        %422 = vmatprep.subr.mxu0 0.0
        %423 = vmatpush1.msra.mxu0 0.0
        %424 = vmatprep.subr.mxu0 0.0
        %425 = vmatpush1.msra.mxu0 0.0
        %426 = vmatprep.subr.mxu0 0.0
        %427 = vmatpush1.msra.mxu0 0.0
        %428 = vmatprep.subr.mxu0 0.0
        %429 = vmatpush1.msra.mxu0 0.0
        %430 = vmatprep.subr.mxu0 0.0
        %431 = vmatpush1.msra.mxu0 0.0
        %432 = vmatprep.subr.mxu0 0.0
        %433 = vmatpush1.msra.mxu0 0.0
        %434 = vmatprep.subr.mxu0 0.0
        %435 = vmatpush1.msra.mxu0 0.0
        %436 = vmatprep.subr.mxu0 0.0
        %437 = vmatpush1.msra.mxu0 0.0
        %438 = vmatprep.subr.mxu0 0.0
        %439 = vmatpush1.msra.mxu0 0.0
        %440 = vmatprep.subr.mxu0 0.0
        %441 = vmatpush1.msra.mxu0 0.0
        %442 = vmatprep.subr.mxu0 0.0
        %443 = vmatpush1.msra.mxu0 0.0
        %444 = vmatprep.subr.mxu0 0.0
        %445 = vmatpush1.msra.mxu0 0.0
        %446 = vmatprep.subr.mxu0 0.0
        %447 = vmatpush1.msra.mxu0 0.0
        %448 = vmatprep.subr.mxu0 0.0
        %449 = vmatpush1.msra.mxu0 0.0
        %450 = vmatprep.subr.mxu0 0.0
        %451 = vmatpush1.msra.mxu0 0.0
        %452 = vmatprep.subr.mxu0 0.0
        %453 = vmatpush1.msra.mxu0 0.0
        %454 = vmatprep.subr.mxu0 0.0
        %455 = vmatpush1.msra.mxu0 0.0
        %456 = vmatprep.subr.mxu0 0.0
        %457 = vmatpush1.msra.mxu0 0.0
        %458 = vmatprep.subr.mxu0 0.0
        %459 = vmatpush1.msra.mxu0 0.0
        %460 = vmatprep.subr.mxu0 0.0
        %461 = vmatpush1.msra.mxu0 0.0
        %462 = vmatprep.subr.mxu0 0.0
        %463 = vmatpush1.msra.mxu0 0.0
        %464 = vmatprep.subr.mxu0 0.0
        %465 = vmatpush1.msra.mxu0 0.0
        %466 = vmatprep.subr.mxu0 0.0
        %467 = vmatpush1.msra.mxu0 0.0
        %468 = vmatprep.mubr.f32.mxu0 0.0
        %469 = vmatmul.mubr.f32.gmra.mrb[0].mxu0 %v402
        %v470 = vpop.f32.mrb[0].mxu0
        %v471 = vadd.f32 0.0, %v470
        %v472 = vpop.f32.mrb[0].mxu0
        %473 = vdwg.mxu0
        %v475 = vsel %vm400, %v392, 0
        %477 = vmatprep.subr.mxu0 0.0
        %478 = vmatpush1.msra.mxu0 %v393
        %479 = vmatprep.subr.mxu0 0.0
        %480 = vmatpush1.msra.mxu0 0.0
        %481 = vmatprep.subr.mxu0 0.0
        %482 = vmatpush1.msra.mxu0 0.0
        %483 = vmatprep.subr.mxu0 0.0
        %484 = vmatpush1.msra.mxu0 0.0
        %485 = vmatprep.subr.mxu0 0.0
        %486 = vmatpush1.msra.mxu0 0.0
        %487 = vmatprep.subr.mxu0 0.0
        %488 = vmatpush1.msra.mxu0 0.0
        %489 = vmatprep.subr.mxu0 0.0
        %490 = vmatpush1.msra.mxu0 0.0
        %491 = vmatprep.subr.mxu0 0.0
        %492 = vmatpush1.msra.mxu0 0.0
        %493 = vmatprep.subr.mxu0 0.0
        %494 = vmatpush1.msra.mxu0 0.0
        %495 = vmatprep.subr.mxu0 0.0
        %496 = vmatpush1.msra.mxu0 0.0
        %497 = vmatprep.subr.mxu0 0.0
        %498 = vmatpush1.msra.mxu0 0.0
        %499 = vmatprep.subr.mxu0 0.0
        %500 = vmatpush1.msra.mxu0 0.0
        %501 = vmatprep.subr.mxu0 0.0
        %502 = vmatpush1.msra.mxu0 0.0
        %503 = vmatprep.subr.mxu0 0.0
        %504 = vmatpush1.msra.mxu0 0.0
        %505 = vmatprep.subr.mxu0 0.0
        %506 = vmatpush1.msra.mxu0 0.0
        %507 = vmatprep.subr.mxu0 0.0
        %508 = vmatpush1.msra.mxu0 0.0
        %509 = vmatprep.subr.mxu0 0.0
        %510 = vmatpush1.msra.mxu0 0.0
        %511 = vmatprep.subr.mxu0 0.0
        %512 = vmatpush1.msra.mxu0 0.0
        %513 = vmatprep.subr.mxu0 0.0
        %514 = vmatpush1.msra.mxu0 0.0
        %515 = vmatprep.subr.mxu0 0.0
        %516 = vmatpush1.msra.mxu0 0.0
        %517 = vmatprep.subr.mxu0 0.0
        %518 = vmatpush1.msra.mxu0 0.0
        %519 = vmatprep.subr.mxu0 0.0
        %520 = vmatpush1.msra.mxu0 0.0
        %521 = vmatprep.subr.mxu0 0.0
        %522 = vmatpush1.msra.mxu0 0.0
        %523 = vmatprep.subr.mxu0 0.0
        %524 = vmatpush1.msra.mxu0 0.0
        %525 = vmatprep.subr.mxu0 0.0
        %526 = vmatpush1.msra.mxu0 0.0
        %527 = vmatprep.subr.mxu0 0.0
        %528 = vmatpush1.msra.mxu0 0.0
        %529 = vmatprep.subr.mxu0 0.0
        %530 = vmatpush1.msra.mxu0 0.0
        %531 = vmatprep.subr.mxu0 0.0
        %532 = vmatpush1.msra.mxu0 0.0
        %533 = vmatprep.subr.mxu0 0.0
        %534 = vmatpush1.msra.mxu0 0.0
        %535 = vmatprep.subr.mxu0 0.0
        %536 = vmatpush1.msra.mxu0 0.0
        %537 = vmatprep.subr.mxu0 0.0
        %538 = vmatpush1.msra.mxu0 0.0
        %539 = vmatprep.subr.mxu0 0.0
        %540 = vmatpush1.msra.mxu0 0.0
        %541 = vmatprep.mubr.f32.mxu0 0.0
        %542 = vmatmul.mubr.f32.gmra.mrb[0].mxu0 %v475
        %v543 = vpop.f32.mrb[0].mxu0
        %v544 = vadd.f32 %v471, %v543
        %v545 = vpop.f32.mrb[0].mxu0
        %546 = vdwg.mxu0
        %s547 = scalar_lea.vmem %s1, 16
        %v548 = vld [vmem:[%s547] sm:$0xff]
        %549 = vrot.lane.b32.xlu0 %v393, 126
        %v550 = vpop.permute.xlu0 %549
        %v553 = vsel %vm400, %v548, 0
        %555 = vmatprep.subr.mxu0 0.0
        %556 = vmatpush1.msra.mxu0 %v550
        %557 = vmatprep.subr.mxu0 0.0
        %558 = vmatpush1.msra.mxu0 0.0
        %559 = vmatprep.subr.mxu0 0.0
        %560 = vmatpush1.msra.mxu0 0.0
        %561 = vmatprep.subr.mxu0 0.0
        %562 = vmatpush1.msra.mxu0 0.0
        %563 = vmatprep.subr.mxu0 0.0
        %564 = vmatpush1.msra.mxu0 0.0
        %565 = vmatprep.subr.mxu0 0.0
        %566 = vmatpush1.msra.mxu0 0.0
        %567 = vmatprep.subr.mxu0 0.0
        %568 = vmatpush1.msra.mxu0 0.0
        %569 = vmatprep.subr.mxu0 0.0
        %570 = vmatpush1.msra.mxu0 0.0
        %571 = vmatprep.subr.mxu0 0.0
        %572 = vmatpush1.msra.mxu0 0.0
        %573 = vmatprep.subr.mxu0 0.0
        %574 = vmatpush1.msra.mxu0 0.0
        %575 = vmatprep.subr.mxu0 0.0
        %576 = vmatpush1.msra.mxu0 0.0
        %577 = vmatprep.subr.mxu0 0.0
        %578 = vmatpush1.msra.mxu0 0.0
        %579 = vmatprep.subr.mxu0 0.0
        %580 = vmatpush1.msra.mxu0 0.0
        %581 = vmatprep.subr.mxu0 0.0
        %582 = vmatpush1.msra.mxu0 0.0
        %583 = vmatprep.subr.mxu0 0.0
        %584 = vmatpush1.msra.mxu0 0.0
        %585 = vmatprep.subr.mxu0 0.0
        %586 = vmatpush1.msra.mxu0 0.0
        %587 = vmatprep.subr.mxu0 0.0
        %588 = vmatpush1.msra.mxu0 0.0
        %589 = vmatprep.subr.mxu0 0.0
        %590 = vmatpush1.msra.mxu0 0.0
        %591 = vmatprep.subr.mxu0 0.0
        %592 = vmatpush1.msra.mxu0 0.0
        %593 = vmatprep.subr.mxu0 0.0
        %594 = vmatpush1.msra.mxu0 0.0
        %595 = vmatprep.subr.mxu0 0.0
        %596 = vmatpush1.msra.mxu0 0.0
        %597 = vmatprep.subr.mxu0 0.0
        %598 = vmatpush1.msra.mxu0 0.0
        %599 = vmatprep.subr.mxu0 0.0
        %600 = vmatpush1.msra.mxu0 0.0
        %601 = vmatprep.subr.mxu0 0.0
        %602 = vmatpush1.msra.mxu0 0.0
        %603 = vmatprep.subr.mxu0 0.0
        %604 = vmatpush1.msra.mxu0 0.0
        %605 = vmatprep.subr.mxu0 0.0
        %606 = vmatpush1.msra.mxu0 0.0
        %607 = vmatprep.subr.mxu0 0.0
        %608 = vmatpush1.msra.mxu0 0.0
        %609 = vmatprep.subr.mxu0 0.0
        %610 = vmatpush1.msra.mxu0 0.0
        %611 = vmatprep.subr.mxu0 0.0
        %612 = vmatpush1.msra.mxu0 0.0
        %613 = vmatprep.subr.mxu0 0.0
        %614 = vmatpush1.msra.mxu0 0.0
        %615 = vmatprep.subr.mxu0 0.0
        %616 = vmatpush1.msra.mxu0 0.0
        %617 = vmatprep.subr.mxu0 0.0
        %618 = vmatpush1.msra.mxu0 0.0
        %619 = vmatprep.mubr.f32.mxu0 0.0
        %620 = vmatmul.mubr.f32.gmra.mrb[0].mxu0 %v553
        %v621 = vpop.f32.mrb[0].mxu0
        %v622 = vadd.f32 0.0, %v621
        %v623 = vpop.f32.mrb[0].mxu0
        %624 = vdwg.mxu0
        %v625 = vadd.f32 %v544, %v622
        %v626 = vld [vmem:[%s2] sm:$0xff]
        %628 = vset.pattern.permute.xlu0 0
        %629 = vperm.xlu0 %628, %v626
        %v630 = vpop.permute.xlu0 %629
        %v632 = vadd.f32 %v625, %v630
        %v633 = vmax.f32 %v632, 0.0
        %635 = vrot.lane.b32.xlu0 %v633, 2
        %v636 = vpop.permute.xlu0 %635
        %638 = vst.msk [vmem:[#allocation2] sm:$0xff] %vm390, %v636
        %v639 = vld [vmem:[%s3] sm:$0xff]
        %v640 = vld [vmem:[#allocation2] sm:$0xff]
        %s641 = scalar_lea.vmem %s3, 8
        %v642 = vld [vmem:[%s641] sm:$0xff]
        %644 = vrot.lane.b32.xlu0 %v640, 127
        %v645 = vpop.permute.xlu0 %644
        %v648 = vsel %vm400, %v642, 0
        %650 = vmatprep.subr.mxu0 0.0
        %651 = vmatpush1.msra.mxu0 %v645
        %652 = vmatprep.subr.mxu0 0.0
        %653 = vmatpush1.msra.mxu0 0.0
        %654 = vmatprep.subr.mxu0 0.0
        %655 = vmatpush1.msra.mxu0 0.0
        %656 = vmatprep.subr.mxu0 0.0
        %657 = vmatpush1.msra.mxu0 0.0
        %658 = vmatprep.subr.mxu0 0.0
        %659 = vmatpush1.msra.mxu0 0.0
        %660 = vmatprep.subr.mxu0 0.0
        %661 = vmatpush1.msra.mxu0 0.0
        %662 = vmatprep.subr.mxu0 0.0
        %663 = vmatpush1.msra.mxu0 0.0
        %664 = vmatprep.subr.mxu0 0.0
        %665 = vmatpush1.msra.mxu0 0.0
        %666 = vmatprep.subr.mxu0 0.0
        %667 = vmatpush1.msra.mxu0 0.0
        %668 = vmatprep.subr.mxu0 0.0
        %669 = vmatpush1.msra.mxu0 0.0
        %670 = vmatprep.subr.mxu0 0.0
        %671 = vmatpush1.msra.mxu0 0.0
        %672 = vmatprep.subr.mxu0 0.0
        %673 = vmatpush1.msra.mxu0 0.0
        %674 = vmatprep.subr.mxu0 0.0
        %675 = vmatpush1.msra.mxu0 0.0
        %676 = vmatprep.subr.mxu0 0.0
        %677 = vmatpush1.msra.mxu0 0.0
        %678 = vmatprep.subr.mxu0 0.0
        %679 = vmatpush1.msra.mxu0 0.0
        %680 = vmatprep.subr.mxu0 0.0
        %681 = vmatpush1.msra.mxu0 0.0
        %682 = vmatprep.subr.mxu0 0.0
        %683 = vmatpush1.msra.mxu0 0.0
        %684 = vmatprep.subr.mxu0 0.0
        %685 = vmatpush1.msra.mxu0 0.0
        %686 = vmatprep.subr.mxu0 0.0
        %687 = vmatpush1.msra.mxu0 0.0
        %688 = vmatprep.subr.mxu0 0.0
        %689 = vmatpush1.msra.mxu0 0.0
        %690 = vmatprep.subr.mxu0 0.0
        %691 = vmatpush1.msra.mxu0 0.0
        %692 = vmatprep.subr.mxu0 0.0
        %693 = vmatpush1.msra.mxu0 0.0
        %694 = vmatprep.subr.mxu0 0.0
        %695 = vmatpush1.msra.mxu0 0.0
        %696 = vmatprep.subr.mxu0 0.0
        %697 = vmatpush1.msra.mxu0 0.0
        %698 = vmatprep.subr.mxu0 0.0
        %699 = vmatpush1.msra.mxu0 0.0
        %700 = vmatprep.subr.mxu0 0.0
        %701 = vmatpush1.msra.mxu0 0.0
        %702 = vmatprep.subr.mxu0 0.0
        %703 = vmatpush1.msra.mxu0 0.0
        %704 = vmatprep.subr.mxu0 0.0
        %705 = vmatpush1.msra.mxu0 0.0
        %706 = vmatprep.subr.mxu0 0.0
        %707 = vmatpush1.msra.mxu0 0.0
        %708 = vmatprep.subr.mxu0 0.0
        %709 = vmatpush1.msra.mxu0 0.0
        %710 = vmatprep.subr.mxu0 0.0
        %711 = vmatpush1.msra.mxu0 0.0
        %712 = vmatprep.subr.mxu0 0.0
        %713 = vmatpush1.msra.mxu0 0.0
        %714 = vmatprep.mubr.f32.mxu0 0.0
        %715 = vmatmul.mubr.f32.gmra.mrb[0].mxu0 %v648
        %v716 = vpop.f32.mrb[0].mxu0
        %v717 = vadd.f32 0.0, %v716
        %v718 = vpop.f32.mrb[0].mxu0
        %719 = vdwg.mxu0
        %v721 = vsel %vm400, %v639, 0
        %723 = vmatprep.subr.mxu0 0.0
        %724 = vmatpush1.msra.mxu0 %v640
        %725 = vmatprep.subr.mxu0 0.0
        %726 = vmatpush1.msra.mxu0 0.0
        %727 = vmatprep.subr.mxu0 0.0
        %728 = vmatpush1.msra.mxu0 0.0
        %729 = vmatprep.subr.mxu0 0.0
        %730 = vmatpush1.msra.mxu0 0.0
        %731 = vmatprep.subr.mxu0 0.0
        %732 = vmatpush1.msra.mxu0 0.0
        %733 = vmatprep.subr.mxu0 0.0
        %734 = vmatpush1.msra.mxu0 0.0
        %735 = vmatprep.subr.mxu0 0.0
        %736 = vmatpush1.msra.mxu0 0.0
        %737 = vmatprep.subr.mxu0 0.0
        %738 = vmatpush1.msra.mxu0 0.0
        %739 = vmatprep.subr.mxu0 0.0
        %740 = vmatpush1.msra.mxu0 0.0
        %741 = vmatprep.subr.mxu0 0.0
        %742 = vmatpush1.msra.mxu0 0.0
        %743 = vmatprep.subr.mxu0 0.0
        %744 = vmatpush1.msra.mxu0 0.0
        %745 = vmatprep.subr.mxu0 0.0
        %746 = vmatpush1.msra.mxu0 0.0
        %747 = vmatprep.subr.mxu0 0.0
        %748 = vmatpush1.msra.mxu0 0.0
        %749 = vmatprep.subr.mxu0 0.0
        %750 = vmatpush1.msra.mxu0 0.0
        %751 = vmatprep.subr.mxu0 0.0
        %752 = vmatpush1.msra.mxu0 0.0
        %753 = vmatprep.subr.mxu0 0.0
        %754 = vmatpush1.msra.mxu0 0.0
        %755 = vmatprep.subr.mxu0 0.0
        %756 = vmatpush1.msra.mxu0 0.0
        %757 = vmatprep.subr.mxu0 0.0
        %758 = vmatpush1.msra.mxu0 0.0
        %759 = vmatprep.subr.mxu0 0.0
        %760 = vmatpush1.msra.mxu0 0.0
        %761 = vmatprep.subr.mxu0 0.0
        %762 = vmatpush1.msra.mxu0 0.0
        %763 = vmatprep.subr.mxu0 0.0
        %764 = vmatpush1.msra.mxu0 0.0
        %765 = vmatprep.subr.mxu0 0.0
        %766 = vmatpush1.msra.mxu0 0.0
        %767 = vmatprep.subr.mxu0 0.0
        %768 = vmatpush1.msra.mxu0 0.0
        %769 = vmatprep.subr.mxu0 0.0
        %770 = vmatpush1.msra.mxu0 0.0
        %771 = vmatprep.subr.mxu0 0.0
        %772 = vmatpush1.msra.mxu0 0.0
        %773 = vmatprep.subr.mxu0 0.0
        %774 = vmatpush1.msra.mxu0 0.0
        %775 = vmatprep.subr.mxu0 0.0
        %776 = vmatpush1.msra.mxu0 0.0
        %777 = vmatprep.subr.mxu0 0.0
        %778 = vmatpush1.msra.mxu0 0.0
        %779 = vmatprep.subr.mxu0 0.0
        %780 = vmatpush1.msra.mxu0 0.0
        %781 = vmatprep.subr.mxu0 0.0
        %782 = vmatpush1.msra.mxu0 0.0
        %783 = vmatprep.subr.mxu0 0.0
        %784 = vmatpush1.msra.mxu0 0.0
        %785 = vmatprep.subr.mxu0 0.0
        %786 = vmatpush1.msra.mxu0 0.0
        %787 = vmatprep.mubr.f32.mxu0 0.0
        %788 = vmatmul.mubr.f32.gmra.mrb[0].mxu0 %v721
        %v789 = vpop.f32.mrb[0].mxu0
        %v790 = vadd.f32 %v717, %v789
        %v791 = vpop.f32.mrb[0].mxu0
        %792 = vdwg.mxu0
        %s793 = scalar_lea.vmem %s3, 16
        %v794 = vld [vmem:[%s793] sm:$0xff]
        %795 = vrot.lane.b32.xlu0 %v640, 126
        %v796 = vpop.permute.xlu0 %795
        %v799 = vsel %vm400, %v794, 0
        %801 = vmatprep.subr.mxu0 0.0
        %802 = vmatpush1.msra.mxu0 %v796
        %803 = vmatprep.subr.mxu0 0.0
        %804 = vmatpush1.msra.mxu0 0.0
        %805 = vmatprep.subr.mxu0 0.0
        %806 = vmatpush1.msra.mxu0 0.0
        %807 = vmatprep.subr.mxu0 0.0
        %808 = vmatpush1.msra.mxu0 0.0
        %809 = vmatprep.subr.mxu0 0.0
        %810 = vmatpush1.msra.mxu0 0.0
        %811 = vmatprep.subr.mxu0 0.0
        %812 = vmatpush1.msra.mxu0 0.0
        %813 = vmatprep.subr.mxu0 0.0
        %814 = vmatpush1.msra.mxu0 0.0
        %815 = vmatprep.subr.mxu0 0.0
        %816 = vmatpush1.msra.mxu0 0.0
        %817 = vmatprep.subr.mxu0 0.0
        %818 = vmatpush1.msra.mxu0 0.0
        %819 = vmatprep.subr.mxu0 0.0
        %820 = vmatpush1.msra.mxu0 0.0
        %821 = vmatprep.subr.mxu0 0.0
        %822 = vmatpush1.msra.mxu0 0.0
        %823 = vmatprep.subr.mxu0 0.0
        %824 = vmatpush1.msra.mxu0 0.0
        %825 = vmatprep.subr.mxu0 0.0
        %826 = vmatpush1.msra.mxu0 0.0
        %827 = vmatprep.subr.mxu0 0.0
        %828 = vmatpush1.msra.mxu0 0.0
        %829 = vmatprep.subr.mxu0 0.0
        %830 = vmatpush1.msra.mxu0 0.0
        %831 = vmatprep.subr.mxu0 0.0
        %832 = vmatpush1.msra.mxu0 0.0
        %833 = vmatprep.subr.mxu0 0.0
        %834 = vmatpush1.msra.mxu0 0.0
        %835 = vmatprep.subr.mxu0 0.0
        %836 = vmatpush1.msra.mxu0 0.0
        %837 = vmatprep.subr.mxu0 0.0
        %838 = vmatpush1.msra.mxu0 0.0
        %839 = vmatprep.subr.mxu0 0.0
        %840 = vmatpush1.msra.mxu0 0.0
        %841 = vmatprep.subr.mxu0 0.0
        %842 = vmatpush1.msra.mxu0 0.0
        %843 = vmatprep.subr.mxu0 0.0
        %844 = vmatpush1.msra.mxu0 0.0
        %845 = vmatprep.subr.mxu0 0.0
        %846 = vmatpush1.msra.mxu0 0.0
        %847 = vmatprep.subr.mxu0 0.0
        %848 = vmatpush1.msra.mxu0 0.0
        %849 = vmatprep.subr.mxu0 0.0
        %850 = vmatpush1.msra.mxu0 0.0
        %851 = vmatprep.subr.mxu0 0.0
        %852 = vmatpush1.msra.mxu0 0.0
        %853 = vmatprep.subr.mxu0 0.0
        %854 = vmatpush1.msra.mxu0 0.0
        %855 = vmatprep.subr.mxu0 0.0
        %856 = vmatpush1.msra.mxu0 0.0
        %857 = vmatprep.subr.mxu0 0.0
        %858 = vmatpush1.msra.mxu0 0.0
        %859 = vmatprep.subr.mxu0 0.0
        %860 = vmatpush1.msra.mxu0 0.0
        %861 = vmatprep.subr.mxu0 0.0
        %862 = vmatpush1.msra.mxu0 0.0
        %863 = vmatprep.subr.mxu0 0.0
        %864 = vmatpush1.msra.mxu0 0.0
        %865 = vmatprep.mubr.f32.mxu0 0.0
        %866 = vmatmul.mubr.f32.gmra.mrb[0].mxu0 %v799
        %v867 = vpop.f32.mrb[0].mxu0
        %v868 = vadd.f32 0.0, %v867
        %v869 = vpop.f32.mrb[0].mxu0
        %870 = vdwg.mxu0
        %v871 = vadd.f32 %v790, %v868
        %v872 = vld [vmem:[%s4] sm:$0xff]
        %874 = vset.pattern.permute.xlu0 0
        %875 = vperm.xlu0 %874, %v872
        %v876 = vpop.permute.xlu0 %875
        %v878 = vadd.f32 %v871, %v876
        %v879 = vmax.f32 %v878, 0.0
        %v880 = vadd.f32 %v879, %v385
        %v881 = vmax.f32 %v880, 0.0
        %883 = vrot.lane.b32.xlu0 %v881, 2
        %v884 = vpop.permute.xlu0 %883
        %886 = vst.msk [vmem:[#allocation2] sm:$0xff] %vm390, %v884
        %v887 = vld [vmem:[%s5] sm:$0xff]
        %v888 = vld [vmem:[%s5 + $0x8] sm:$0xff]
        %v889 = vld [vmem:[#allocation2] sm:$0xff]
        %s890 = scalar_lea.vmem %s5, 16
        %v891 = vld [vmem:[%s890] sm:$0xff]
        %v892 = vld [vmem:[%s890 + $0x8] sm:$0xff]
        %894 = vrot.lane.b32.xlu0 %v889, 127
        %v895 = vpop.permute.xlu0 %894
        %v898 = vsel %vm400, %v891, 0
        %v901 = vsel %vm400, %v892, 0
        %903 = vmatprep.subr.mxu0 0.0
        %904 = vmatpush1.msra.mxu0 %v895
        %905 = vmatprep.subr.mxu0 0.0
        %906 = vmatpush1.msra.mxu0 0.0
        %907 = vmatprep.subr.mxu0 0.0
        %908 = vmatpush1.msra.mxu0 0.0
        %909 = vmatprep.subr.mxu0 0.0
        %910 = vmatpush1.msra.mxu0 0.0
        %911 = vmatprep.subr.mxu0 0.0
        %912 = vmatpush1.msra.mxu0 0.0
        %913 = vmatprep.subr.mxu0 0.0
        %914 = vmatpush1.msra.mxu0 0.0
        %915 = vmatprep.subr.mxu0 0.0
        %916 = vmatpush1.msra.mxu0 0.0
        %917 = vmatprep.subr.mxu0 0.0
        %918 = vmatpush1.msra.mxu0 0.0
        %919 = vmatprep.subr.mxu0 0.0
        %920 = vmatpush1.msra.mxu0 0.0
        %921 = vmatprep.subr.mxu0 0.0
        %922 = vmatpush1.msra.mxu0 0.0
        %923 = vmatprep.subr.mxu0 0.0
        %924 = vmatpush1.msra.mxu0 0.0
        %925 = vmatprep.subr.mxu0 0.0
        %926 = vmatpush1.msra.mxu0 0.0
        %927 = vmatprep.subr.mxu0 0.0
        %928 = vmatpush1.msra.mxu0 0.0
        %929 = vmatprep.subr.mxu0 0.0
        %930 = vmatpush1.msra.mxu0 0.0
        %931 = vmatprep.subr.mxu0 0.0
        %932 = vmatpush1.msra.mxu0 0.0
        %933 = vmatprep.subr.mxu0 0.0
        %934 = vmatpush1.msra.mxu0 0.0
        %935 = vmatprep.subr.mxu0 0.0
        %936 = vmatpush1.msra.mxu0 0.0
        %937 = vmatprep.subr.mxu0 0.0
        %938 = vmatpush1.msra.mxu0 0.0
        %939 = vmatprep.subr.mxu0 0.0
        %940 = vmatpush1.msra.mxu0 0.0
        %941 = vmatprep.subr.mxu0 0.0
        %942 = vmatpush1.msra.mxu0 0.0
        %943 = vmatprep.subr.mxu0 0.0
        %944 = vmatpush1.msra.mxu0 0.0
        %945 = vmatprep.subr.mxu0 0.0
        %946 = vmatpush1.msra.mxu0 0.0
        %947 = vmatprep.subr.mxu0 0.0
        %948 = vmatpush1.msra.mxu0 0.0
        %949 = vmatprep.subr.mxu0 0.0
        %950 = vmatpush1.msra.mxu0 0.0
        %951 = vmatprep.subr.mxu0 0.0
        %952 = vmatpush1.msra.mxu0 0.0
        %953 = vmatprep.subr.mxu0 0.0
        %954 = vmatpush1.msra.mxu0 0.0
        %955 = vmatprep.subr.mxu0 0.0
        %956 = vmatpush1.msra.mxu0 0.0
        %957 = vmatprep.subr.mxu0 0.0
        %958 = vmatpush1.msra.mxu0 0.0
        %959 = vmatprep.subr.mxu0 0.0
        %960 = vmatpush1.msra.mxu0 0.0
        %961 = vmatprep.subr.mxu0 0.0
        %962 = vmatpush1.msra.mxu0 0.0
        %963 = vmatprep.subr.mxu0 0.0
        %964 = vmatpush1.msra.mxu0 0.0
        %965 = vmatprep.subr.mxu0 0.0
        %966 = vmatpush1.msra.mxu0 0.0
        %967 = vmatprep.mubr.f32.mxu0 0.0
        %968 = vmatmul.mubr.f32.gmra.mrb[0].mxu0 %v898
        %v969 = vpop.f32.mrb[0].mxu0
        %v970 = vadd.f32 0.0, %v969
        %v971 = vpop.f32.mrb[0].mxu0
        %972 = vmatprep.mubr.f32.mxu0 0.0
        %973 = vmatmul.mubr.f32.gmra.mrb[0].mxu0 %v901
        %v974 = vpop.f32.mrb[0].mxu0
        %v975 = vadd.f32 0.0, %v974
        %v976 = vpop.f32.mrb[0].mxu0
        %977 = vdwg.mxu0
        %v979 = vsel %vm400, %v887, 0
        %v982 = vsel %vm400, %v888, 0
        %984 = vmatprep.subr.mxu0 0.0
        %985 = vmatpush1.msra.mxu0 %v889
        %986 = vmatprep.subr.mxu0 0.0
        %987 = vmatpush1.msra.mxu0 0.0
        %988 = vmatprep.subr.mxu0 0.0
        %989 = vmatpush1.msra.mxu0 0.0
        %990 = vmatprep.subr.mxu0 0.0
        %991 = vmatpush1.msra.mxu0 0.0
        %992 = vmatprep.subr.mxu0 0.0
        %993 = vmatpush1.msra.mxu0 0.0
        %994 = vmatprep.subr.mxu0 0.0
        %995 = vmatpush1.msra.mxu0 0.0
        %996 = vmatprep.subr.mxu0 0.0
        %997 = vmatpush1.msra.mxu0 0.0
        %998 = vmatprep.subr.mxu0 0.0
        %999 = vmatpush1.msra.mxu0 0.0
        %1000 = vmatprep.subr.mxu0 0.0
        %1001 = vmatpush1.msra.mxu0 0.0
        %1002 = vmatprep.subr.mxu0 0.0
        %1003 = vmatpush1.msra.mxu0 0.0
        %1004 = vmatprep.subr.mxu0 0.0
        %1005 = vmatpush1.msra.mxu0 0.0
        %1006 = vmatprep.subr.mxu0 0.0
        %1007 = vmatpush1.msra.mxu0 0.0
        %1008 = vmatprep.subr.mxu0 0.0
        %1009 = vmatpush1.msra.mxu0 0.0
        %1010 = vmatprep.subr.mxu0 0.0
        %1011 = vmatpush1.msra.mxu0 0.0
        %1012 = vmatprep.subr.mxu0 0.0
        %1013 = vmatpush1.msra.mxu0 0.0
        %1014 = vmatprep.subr.mxu0 0.0
        %1015 = vmatpush1.msra.mxu0 0.0
        %1016 = vmatprep.subr.mxu0 0.0
        %1017 = vmatpush1.msra.mxu0 0.0
        %1018 = vmatprep.subr.mxu0 0.0
        %1019 = vmatpush1.msra.mxu0 0.0
        %1020 = vmatprep.subr.mxu0 0.0
        %1021 = vmatpush1.msra.mxu0 0.0
        %1022 = vmatprep.subr.mxu0 0.0
        %1023 = vmatpush1.msra.mxu0 0.0
        %1024 = vmatprep.subr.mxu0 0.0
        %1025 = vmatpush1.msra.mxu0 0.0
        %1026 = vmatprep.subr.mxu0 0.0
        %1027 = vmatpush1.msra.mxu0 0.0
        %1028 = vmatprep.subr.mxu0 0.0
        %1029 = vmatpush1.msra.mxu0 0.0
        %1030 = vmatprep.subr.mxu0 0.0
        %1031 = vmatpush1.msra.mxu0 0.0
        %1032 = vmatprep.subr.mxu0 0.0
        %1033 = vmatpush1.msra.mxu0 0.0
        %1034 = vmatprep.subr.mxu0 0.0
        %1035 = vmatpush1.msra.mxu0 0.0
        %1036 = vmatprep.subr.mxu0 0.0
        %1037 = vmatpush1.msra.mxu0 0.0
        %1038 = vmatprep.subr.mxu0 0.0
        %1039 = vmatpush1.msra.mxu0 0.0
        %1040 = vmatprep.subr.mxu0 0.0
        %1041 = vmatpush1.msra.mxu0 0.0
        %1042 = vmatprep.subr.mxu0 0.0
        %1043 = vmatpush1.msra.mxu0 0.0
        %1044 = vmatprep.subr.mxu0 0.0
        %1045 = vmatpush1.msra.mxu0 0.0
        %1046 = vmatprep.subr.mxu0 0.0
        %1047 = vmatpush1.msra.mxu0 0.0
        %1048 = vmatprep.mubr.f32.mxu0 0.0
        %1049 = vmatmul.mubr.f32.gmra.mrb[0].mxu0 %v979
        %v1050 = vpop.f32.mrb[0].mxu0
        %v1051 = vadd.f32 %v970, %v1050
        %v1052 = vpop.f32.mrb[0].mxu0
        %1053 = vmatprep.mubr.f32.mxu0 0.0
        %1054 = vmatmul.mubr.f32.gmra.mrb[0].mxu0 %v982
        %v1055 = vpop.f32.mrb[0].mxu0
        %v1056 = vadd.f32 %v975, %v1055
        %v1057 = vpop.f32.mrb[0].mxu0
        %1058 = vdwg.mxu0
        %s1059 = scalar_lea.vmem %s5, 32
        %v1060 = vld [vmem:[%s1059] sm:$0xff]
        %v1061 = vld [vmem:[%s1059 + $0x8] sm:$0xff]
        %1062 = vrot.lane.b32.xlu0 %v889, 126
        %v1063 = vpop.permute.xlu0 %1062
        %v1066 = vsel %vm400, %v1060, 0
        %v1069 = vsel %vm400, %v1061, 0
        %1071 = vmatprep.subr.mxu0 0.0
        %1072 = vmatpush1.msra.mxu0 %v1063
        %1073 = vmatprep.subr.mxu0 0.0
        %1074 = vmatpush1.msra.mxu0 0.0
        %1075 = vmatprep.subr.mxu0 0.0
        %1076 = vmatpush1.msra.mxu0 0.0
        %1077 = vmatprep.subr.mxu0 0.0
        %1078 = vmatpush1.msra.mxu0 0.0
        %1079 = vmatprep.subr.mxu0 0.0
        %1080 = vmatpush1.msra.mxu0 0.0
        %1081 = vmatprep.subr.mxu0 0.0
        %1082 = vmatpush1.msra.mxu0 0.0
        %1083 = vmatprep.subr.mxu0 0.0
        %1084 = vmatpush1.msra.mxu0 0.0
        %1085 = vmatprep.subr.mxu0 0.0
        %1086 = vmatpush1.msra.mxu0 0.0
        %1087 = vmatprep.subr.mxu0 0.0
        %1088 = vmatpush1.msra.mxu0 0.0
        %1089 = vmatprep.subr.mxu0 0.0
        %1090 = vmatpush1.msra.mxu0 0.0
        %1091 = vmatprep.subr.mxu0 0.0
        %1092 = vmatpush1.msra.mxu0 0.0
        %1093 = vmatprep.subr.mxu0 0.0
        %1094 = vmatpush1.msra.mxu0 0.0
        %1095 = vmatprep.subr.mxu0 0.0
        %1096 = vmatpush1.msra.mxu0 0.0
        %1097 = vmatprep.subr.mxu0 0.0
        %1098 = vmatpush1.msra.mxu0 0.0
        %1099 = vmatprep.subr.mxu0 0.0
        %1100 = vmatpush1.msra.mxu0 0.0
        %1101 = vmatprep.subr.mxu0 0.0
        %1102 = vmatpush1.msra.mxu0 0.0
        %1103 = vmatprep.subr.mxu0 0.0
        %1104 = vmatpush1.msra.mxu0 0.0
        %1105 = vmatprep.subr.mxu0 0.0
        %1106 = vmatpush1.msra.mxu0 0.0
        %1107 = vmatprep.subr.mxu0 0.0
        %1108 = vmatpush1.msra.mxu0 0.0
        %1109 = vmatprep.subr.mxu0 0.0
        %1110 = vmatpush1.msra.mxu0 0.0
        %1111 = vmatprep.subr.mxu0 0.0
        %1112 = vmatpush1.msra.mxu0 0.0
        %1113 = vmatprep.subr.mxu0 0.0
        %1114 = vmatpush1.msra.mxu0 0.0
        %1115 = vmatprep.subr.mxu0 0.0
        %1116 = vmatpush1.msra.mxu0 0.0
        %1117 = vmatprep.subr.mxu0 0.0
        %1118 = vmatpush1.msra.mxu0 0.0
        %1119 = vmatprep.subr.mxu0 0.0
        %1120 = vmatpush1.msra.mxu0 0.0
        %1121 = vmatprep.subr.mxu0 0.0
        %1122 = vmatpush1.msra.mxu0 0.0
        %1123 = vmatprep.subr.mxu0 0.0
        %1124 = vmatpush1.msra.mxu0 0.0
        %1125 = vmatprep.subr.mxu0 0.0
        %1126 = vmatpush1.msra.mxu0 0.0
        %1127 = vmatprep.subr.mxu0 0.0
        %1128 = vmatpush1.msra.mxu0 0.0
        %1129 = vmatprep.subr.mxu0 0.0
        %1130 = vmatpush1.msra.mxu0 0.0
        %1131 = vmatprep.subr.mxu0 0.0
        %1132 = vmatpush1.msra.mxu0 0.0
        %1133 = vmatprep.subr.mxu0 0.0
        %1134 = vmatpush1.msra.mxu0 0.0
        %1135 = vmatprep.mubr.f32.mxu0 0.0
        %1136 = vmatmul.mubr.f32.gmra.mrb[0].mxu0 %v1066
        %v1137 = vpop.f32.mrb[0].mxu0
        %v1138 = vadd.f32 0.0, %v1137
        %v1139 = vpop.f32.mrb[0].mxu0
        %1140 = vmatprep.mubr.f32.mxu0 0.0
        %1141 = vmatmul.mubr.f32.gmra.mrb[0].mxu0 %v1069
        %v1142 = vpop.f32.mrb[0].mxu0
        %v1143 = vadd.f32 0.0, %v1142
        %v1144 = vpop.f32.mrb[0].mxu0
        %1145 = vdwg.mxu0
        %v1146 = vadd.f32 %v1051, %v1138
        %v1147 = vadd.f32 %v1056, %v1143
        %v1148 = vld [vmem:[%s6] sm:$0xff]
        %v1149 = vld [vmem:[%s6 + $0x8] sm:$0xff]
        %1151 = vset.pattern.permute.xlu0 0
        %1152 = vperm.xlu0 %1151, %v1148
        %v1153 = vpop.permute.xlu0 %1152
        %1156 = vset.pattern.permute.xlu0 0
        %1157 = vperm.xlu0 %1156, %v1149
        %v1158 = vpop.permute.xlu0 %1157
        %v1160 = vadd.f32 %v1146, %v1153
        %v1161 = vadd.f32 %v1147, %v1158
        %v1162 = vmax.f32 %v1160, 0.0
        %v1163 = vmax.f32 %v1161, 0.0
        %1166 = vrot.lane.b32.xlu0 %v1162, 2
        %v1167 = vpop.permute.xlu0 %1166
        %1168 = vrot.lane.b32.xlu0 %v1163, 2
        %v1169 = vpop.permute.xlu0 %1168
        %1172 = vst.msk [vmem:[#allocation2] sm:$0xff] %vm390, %v1167
        %1173 = vst.msk [vmem:[#allocation2 + $0x8] sm:$0xff] %vm390, %v1169
        %v1174 = vld [vmem:[%s7] sm:$0xff]
        %v1175 = vld [vmem:[%s7 + $0x8] sm:$0xff]
        %v1176 = vld [vmem:[#allocation2] sm:$0xff]
        %v1177 = vld [vmem:[#allocation2 + $0x8] sm:$0xff]
        %s1178 = scalar_lea.vmem %s7, 16
        %v1179 = vld [vmem:[%s1178] sm:$0xff]
        %v1180 = vld [vmem:[%s1178 + $0x8] sm:$0xff]
        %1183 = vrot.lane.b32.xlu0 %v1176, 127
        %v1184 = vpop.permute.xlu0 %1183
        %1185 = vrot.lane.b32.xlu0 %v1177, 127
        %v1186 = vpop.permute.xlu0 %1185
        %vm1189 = vcmask 130048
        %v1191 = vsel %vm1189, %v1179, 0
        %v1194 = vsel %vm1189, %v1180, 0
        %1196 = vmatprep.subr.mxu0 0.0
        %1197 = vmatpush1.msra.mxu0 %v1184
        %1198 = vmatprep.subr.mxu0 0.0
        %1199 = vmatpush1.msra.mxu0 %v1186
        %1200 = vmatprep.subr.mxu0 0.0
        %1201 = vmatpush1.msra.mxu0 0.0
        %1202 = vmatprep.subr.mxu0 0.0
        %1203 = vmatpush1.msra.mxu0 0.0
        %1204 = vmatprep.subr.mxu0 0.0
        %1205 = vmatpush1.msra.mxu0 0.0
        %1206 = vmatprep.subr.mxu0 0.0
        %1207 = vmatpush1.msra.mxu0 0.0
        %1208 = vmatprep.subr.mxu0 0.0
        %1209 = vmatpush1.msra.mxu0 0.0
        %1210 = vmatprep.subr.mxu0 0.0
        %1211 = vmatpush1.msra.mxu0 0.0
        %1212 = vmatprep.subr.mxu0 0.0
        %1213 = vmatpush1.msra.mxu0 0.0
        %1214 = vmatprep.subr.mxu0 0.0
        %1215 = vmatpush1.msra.mxu0 0.0
        %1216 = vmatprep.subr.mxu0 0.0
        %1217 = vmatpush1.msra.mxu0 0.0
        %1218 = vmatprep.subr.mxu0 0.0
        %1219 = vmatpush1.msra.mxu0 0.0
        %1220 = vmatprep.subr.mxu0 0.0
        %1221 = vmatpush1.msra.mxu0 0.0
        %1222 = vmatprep.subr.mxu0 0.0
        %1223 = vmatpush1.msra.mxu0 0.0
        %1224 = vmatprep.subr.mxu0 0.0
        %1225 = vmatpush1.msra.mxu0 0.0
        %1226 = vmatprep.subr.mxu0 0.0
        %1227 = vmatpush1.msra.mxu0 0.0
        %1228 = vmatprep.subr.mxu0 0.0
        %1229 = vmatpush1.msra.mxu0 0.0
        %1230 = vmatprep.subr.mxu0 0.0
        %1231 = vmatpush1.msra.mxu0 0.0
        %1232 = vmatprep.subr.mxu0 0.0
        %1233 = vmatpush1.msra.mxu0 0.0
        %1234 = vmatprep.subr.mxu0 0.0
        %1235 = vmatpush1.msra.mxu0 0.0
        %1236 = vmatprep.subr.mxu0 0.0
        %1237 = vmatpush1.msra.mxu0 0.0
        %1238 = vmatprep.subr.mxu0 0.0
        %1239 = vmatpush1.msra.mxu0 0.0
        %1240 = vmatprep.subr.mxu0 0.0
        %1241 = vmatpush1.msra.mxu0 0.0
        %1242 = vmatprep.subr.mxu0 0.0
        %1243 = vmatpush1.msra.mxu0 0.0
        %1244 = vmatprep.subr.mxu0 0.0
        %1245 = vmatpush1.msra.mxu0 0.0
        %1246 = vmatprep.subr.mxu0 0.0
        %1247 = vmatpush1.msra.mxu0 0.0
        %1248 = vmatprep.subr.mxu0 0.0
        %1249 = vmatpush1.msra.mxu0 0.0
        %1250 = vmatprep.subr.mxu0 0.0
        %1251 = vmatpush1.msra.mxu0 0.0
        %1252 = vmatprep.subr.mxu0 0.0
        %1253 = vmatpush1.msra.mxu0 0.0
        %1254 = vmatprep.subr.mxu0 0.0
        %1255 = vmatpush1.msra.mxu0 0.0
        %1256 = vmatprep.subr.mxu0 0.0
        %1257 = vmatpush1.msra.mxu0 0.0
        %1258 = vmatprep.subr.mxu0 0.0
        %1259 = vmatpush1.msra.mxu0 0.0
        %1260 = vmatprep.mubr.f32.mxu0 0.0
        %1261 = vmatmul.mubr.f32.gmra.mrb[0].mxu0 %v1191
        %v1262 = vpop.f32.mrb[0].mxu0
        %v1263 = vadd.f32 0.0, %v1262
        %v1264 = vpop.f32.mrb[0].mxu0
        %1265 = vmatprep.mubr.f32.mxu0 0.0
        %1266 = vmatmul.mubr.f32.gmra.mrb[0].mxu0 %v1194
        %v1267 = vpop.f32.mrb[0].mxu0
        %v1268 = vadd.f32 0.0, %v1267
        %v1269 = vpop.f32.mrb[0].mxu0
        %1270 = vdwg.mxu0
        %v1272 = vsel %vm1189, %v1174, 0
        %v1275 = vsel %vm1189, %v1175, 0
        %1277 = vmatprep.subr.mxu0 0.0
        %1278 = vmatpush1.msra.mxu0 %v1176
        %1279 = vmatprep.subr.mxu0 0.0
        %1280 = vmatpush1.msra.mxu0 %v1177
        %1281 = vmatprep.subr.mxu0 0.0
        %1282 = vmatpush1.msra.mxu0 0.0
        %1283 = vmatprep.subr.mxu0 0.0
        %1284 = vmatpush1.msra.mxu0 0.0
        %1285 = vmatprep.subr.mxu0 0.0
        %1286 = vmatpush1.msra.mxu0 0.0
        %1287 = vmatprep.subr.mxu0 0.0
        %1288 = vmatpush1.msra.mxu0 0.0
        %1289 = vmatprep.subr.mxu0 0.0
        %1290 = vmatpush1.msra.mxu0 0.0
        %1291 = vmatprep.subr.mxu0 0.0
        %1292 = vmatpush1.msra.mxu0 0.0
        %1293 = vmatprep.subr.mxu0 0.0
        %1294 = vmatpush1.msra.mxu0 0.0
        %1295 = vmatprep.subr.mxu0 0.0
        %1296 = vmatpush1.msra.mxu0 0.0
        %1297 = vmatprep.subr.mxu0 0.0
        %1298 = vmatpush1.msra.mxu0 0.0
        %1299 = vmatprep.subr.mxu0 0.0
        %1300 = vmatpush1.msra.mxu0 0.0
        %1301 = vmatprep.subr.mxu0 0.0
        %1302 = vmatpush1.msra.mxu0 0.0
        %1303 = vmatprep.subr.mxu0 0.0
        %1304 = vmatpush1.msra.mxu0 0.0
        %1305 = vmatprep.subr.mxu0 0.0
        %1306 = vmatpush1.msra.mxu0 0.0
        %1307 = vmatprep.subr.mxu0 0.0
        %1308 = vmatpush1.msra.mxu0 0.0
        %1309 = vmatprep.subr.mxu0 0.0
        %1310 = vmatpush1.msra.mxu0 0.0
        %1311 = vmatprep.subr.mxu0 0.0
        %1312 = vmatpush1.msra.mxu0 0.0
        %1313 = vmatprep.subr.mxu0 0.0
        %1314 = vmatpush1.msra.mxu0 0.0
        %1315 = vmatprep.subr.mxu0 0.0
        %1316 = vmatpush1.msra.mxu0 0.0
        %1317 = vmatprep.subr.mxu0 0.0
        %1318 = vmatpush1.msra.mxu0 0.0
        %1319 = vmatprep.subr.mxu0 0.0
        %1320 = vmatpush1.msra.mxu0 0.0
        %1321 = vmatprep.subr.mxu0 0.0
        %1322 = vmatpush1.msra.mxu0 0.0
        %1323 = vmatprep.subr.mxu0 0.0
        %1324 = vmatpush1.msra.mxu0 0.0
        %1325 = vmatprep.subr.mxu0 0.0
        %1326 = vmatpush1.msra.mxu0 0.0
        %1327 = vmatprep.subr.mxu0 0.0
        %1328 = vmatpush1.msra.mxu0 0.0
        %1329 = vmatprep.subr.mxu0 0.0
        %1330 = vmatpush1.msra.mxu0 0.0
        %1331 = vmatprep.subr.mxu0 0.0
        %1332 = vmatpush1.msra.mxu0 0.0
        %1333 = vmatprep.subr.mxu0 0.0
        %1334 = vmatpush1.msra.mxu0 0.0
        %1335 = vmatprep.subr.mxu0 0.0
        %1336 = vmatpush1.msra.mxu0 0.0
        %1337 = vmatprep.subr.mxu0 0.0
        %1338 = vmatpush1.msra.mxu0 0.0
        %1339 = vmatprep.subr.mxu0 0.0
        %1340 = vmatpush1.msra.mxu0 0.0
        %1341 = vmatprep.mubr.f32.mxu0 0.0
        %1342 = vmatmul.mubr.f32.gmra.mrb[0].mxu0 %v1272
        %v1343 = vpop.f32.mrb[0].mxu0
        %v1344 = vadd.f32 %v1263, %v1343
        %v1345 = vpop.f32.mrb[0].mxu0
        %1346 = vmatprep.mubr.f32.mxu0 0.0
        %1347 = vmatmul.mubr.f32.gmra.mrb[0].mxu0 %v1275
        %v1348 = vpop.f32.mrb[0].mxu0
        %v1349 = vadd.f32 %v1268, %v1348
        %v1350 = vpop.f32.mrb[0].mxu0
        %1351 = vdwg.mxu0
        %s1352 = scalar_lea.vmem %s7, 32
        %v1353 = vld [vmem:[%s1352] sm:$0xff]
        %v1354 = vld [vmem:[%s1352 + $0x8] sm:$0xff]
        %1355 = vrot.lane.b32.xlu0 %v1176, 126
        %v1356 = vpop.permute.xlu0 %1355
        %1357 = vrot.lane.b32.xlu0 %v1177, 126
        %v1358 = vpop.permute.xlu0 %1357
        %v1362 = vsel %vm1189, %v1353, 0
        %v1365 = vsel %vm1189, %v1354, 0
        %1367 = vmatprep.subr.mxu0 0.0
        %1368 = vmatpush1.msra.mxu0 %v1356
        %1369 = vmatprep.subr.mxu0 0.0
        %1370 = vmatpush1.msra.mxu0 %v1358
        %1371 = vmatprep.subr.mxu0 0.0
        %1372 = vmatpush1.msra.mxu0 0.0
        %1373 = vmatprep.subr.mxu0 0.0
        %1374 = vmatpush1.msra.mxu0 0.0
        %1375 = vmatprep.subr.mxu0 0.0
        %1376 = vmatpush1.msra.mxu0 0.0
        %1377 = vmatprep.subr.mxu0 0.0
        %1378 = vmatpush1.msra.mxu0 0.0
        %1379 = vmatprep.subr.mxu0 0.0
        %1380 = vmatpush1.msra.mxu0 0.0
        %1381 = vmatprep.subr.mxu0 0.0
        %1382 = vmatpush1.msra.mxu0 0.0
        %1383 = vmatprep.subr.mxu0 0.0
        %1384 = vmatpush1.msra.mxu0 0.0
        %1385 = vmatprep.subr.mxu0 0.0
        %1386 = vmatpush1.msra.mxu0 0.0
        %1387 = vmatprep.subr.mxu0 0.0
        %1388 = vmatpush1.msra.mxu0 0.0
        %1389 = vmatprep.subr.mxu0 0.0
        %1390 = vmatpush1.msra.mxu0 0.0
        %1391 = vmatprep.subr.mxu0 0.0
        %1392 = vmatpush1.msra.mxu0 0.0
        %1393 = vmatprep.subr.mxu0 0.0
        %1394 = vmatpush1.msra.mxu0 0.0
        %1395 = vmatprep.subr.mxu0 0.0
        %1396 = vmatpush1.msra.mxu0 0.0
        %1397 = vmatprep.subr.mxu0 0.0
        %1398 = vmatpush1.msra.mxu0 0.0
        %1399 = vmatprep.subr.mxu0 0.0
        %1400 = vmatpush1.msra.mxu0 0.0
        %1401 = vmatprep.subr.mxu0 0.0
        %1402 = vmatpush1.msra.mxu0 0.0
        %1403 = vmatprep.subr.mxu0 0.0
        %1404 = vmatpush1.msra.mxu0 0.0
        %1405 = vmatprep.subr.mxu0 0.0
        %1406 = vmatpush1.msra.mxu0 0.0
        %1407 = vmatprep.subr.mxu0 0.0
        %1408 = vmatpush1.msra.mxu0 0.0
        %1409 = vmatprep.subr.mxu0 0.0
        %1410 = vmatpush1.msra.mxu0 0.0
        %1411 = vmatprep.subr.mxu0 0.0
        %1412 = vmatpush1.msra.mxu0 0.0
        %1413 = vmatprep.subr.mxu0 0.0
        %1414 = vmatpush1.msra.mxu0 0.0
        %1415 = vmatprep.subr.mxu0 0.0
        %1416 = vmatpush1.msra.mxu0 0.0
        %1417 = vmatprep.subr.mxu0 0.0
        %1418 = vmatpush1.msra.mxu0 0.0
        %1419 = vmatprep.subr.mxu0 0.0
        %1420 = vmatpush1.msra.mxu0 0.0
        %1421 = vmatprep.subr.mxu0 0.0
        %1422 = vmatpush1.msra.mxu0 0.0
        %1423 = vmatprep.subr.mxu0 0.0
        %1424 = vmatpush1.msra.mxu0 0.0
        %1425 = vmatprep.subr.mxu0 0.0
        %1426 = vmatpush1.msra.mxu0 0.0
        %1427 = vmatprep.subr.mxu0 0.0
        %1428 = vmatpush1.msra.mxu0 0.0
        %1429 = vmatprep.subr.mxu0 0.0
        %1430 = vmatpush1.msra.mxu0 0.0
        %1431 = vmatprep.mubr.f32.mxu0 0.0
        %1432 = vmatmul.mubr.f32.gmra.mrb[0].mxu0 %v1362
        %v1433 = vpop.f32.mrb[0].mxu0
        %v1434 = vadd.f32 0.0, %v1433
        %v1435 = vpop.f32.mrb[0].mxu0
        %1436 = vmatprep.mubr.f32.mxu0 0.0
        %1437 = vmatmul.mubr.f32.gmra.mrb[0].mxu0 %v1365
        %v1438 = vpop.f32.mrb[0].mxu0
        %v1439 = vadd.f32 0.0, %v1438
        %v1440 = vpop.f32.mrb[0].mxu0
        %1441 = vdwg.mxu0
        %v1442 = vadd.f32 %v1344, %v1434
        %v1443 = vadd.f32 %v1349, %v1439
        %v1444 = vld [vmem:[%s8] sm:$0xff]
        %v1445 = vld [vmem:[%s8 + $0x8] sm:$0xff]
        %1447 = vset.pattern.permute.xlu0 0
        %1448 = vperm.xlu0 %1447, %v1444
        %v1449 = vpop.permute.xlu0 %1448
        %1452 = vset.pattern.permute.xlu0 0
        %1453 = vperm.xlu0 %1452, %v1445
        %v1454 = vpop.permute.xlu0 %1453
        %v1456 = vadd.f32 %v1442, %v1449
        %v1457 = vadd.f32 %v1443, %v1454
        %v1458 = vmax.f32 %v1456, 0.0
        %v1459 = vmax.f32 %v1457, 0.0
        %v1460 = vld [vmem:[%s9] sm:$0xff]
        %v1461 = vld [vmem:[%s9 + $0x8] sm:$0xff]
        %v1462 = vld [vmem:[%s10] sm:$0xff]
        %v1463 = vld [vmem:[%s10 + $0x8] sm:$0xff]
        %1465 = vset.pattern.permute.xlu0 0
        %1466 = vperm.xlu0 %1465, %v1462
        %v1467 = vpop.permute.xlu0 %1466
        %1470 = vset.pattern.permute.xlu0 0
        %1471 = vperm.xlu0 %1470, %v1463
        %v1472 = vpop.permute.xlu0 %1471
        %v1475 = vsel %vm400, %v1460, 0
        %v1478 = vsel %vm400, %v1461, 0
        %1480 = vmatprep.subr.mxu0 0.0
        %1481 = vmatpush1.msra.mxu0 %v881
        %1482 = vmatprep.subr.mxu0 0.0
        %1483 = vmatpush1.msra.mxu0 0.0
        %1484 = vmatprep.subr.mxu0 0.0
        %1485 = vmatpush1.msra.mxu0 0.0
        %1486 = vmatprep.subr.mxu0 0.0
        %1487 = vmatpush1.msra.mxu0 0.0
        %1488 = vmatprep.subr.mxu0 0.0
        %1489 = vmatpush1.msra.mxu0 0.0
        %1490 = vmatprep.subr.mxu0 0.0
        %1491 = vmatpush1.msra.mxu0 0.0
        %1492 = vmatprep.subr.mxu0 0.0
        %1493 = vmatpush1.msra.mxu0 0.0
        %1494 = vmatprep.subr.mxu0 0.0
        %1495 = vmatpush1.msra.mxu0 0.0
        %1496 = vmatprep.subr.mxu0 0.0
        %1497 = vmatpush1.msra.mxu0 0.0
        %1498 = vmatprep.subr.mxu0 0.0
        %1499 = vmatpush1.msra.mxu0 0.0
        %1500 = vmatprep.subr.mxu0 0.0
        %1501 = vmatpush1.msra.mxu0 0.0
        %1502 = vmatprep.subr.mxu0 0.0
        %1503 = vmatpush1.msra.mxu0 0.0
        %1504 = vmatprep.subr.mxu0 0.0
        %1505 = vmatpush1.msra.mxu0 0.0
        %1506 = vmatprep.subr.mxu0 0.0
        %1507 = vmatpush1.msra.mxu0 0.0
        %1508 = vmatprep.subr.mxu0 0.0
        %1509 = vmatpush1.msra.mxu0 0.0
        %1510 = vmatprep.subr.mxu0 0.0
        %1511 = vmatpush1.msra.mxu0 0.0
        %1512 = vmatprep.subr.mxu0 0.0
        %1513 = vmatpush1.msra.mxu0 0.0
        %1514 = vmatprep.subr.mxu0 0.0
        %1515 = vmatpush1.msra.mxu0 0.0
        %1516 = vmatprep.subr.mxu0 0.0
        %1517 = vmatpush1.msra.mxu0 0.0
        %1518 = vmatprep.subr.mxu0 0.0
        %1519 = vmatpush1.msra.mxu0 0.0
        %1520 = vmatprep.subr.mxu0 0.0
        %1521 = vmatpush1.msra.mxu0 0.0
        %1522 = vmatprep.subr.mxu0 0.0
        %1523 = vmatpush1.msra.mxu0 0.0
        %1524 = vmatprep.subr.mxu0 0.0
        %1525 = vmatpush1.msra.mxu0 0.0
        %1526 = vmatprep.subr.mxu0 0.0
        %1527 = vmatpush1.msra.mxu0 0.0
        %1528 = vmatprep.subr.mxu0 0.0
        %1529 = vmatpush1.msra.mxu0 0.0
        %1530 = vmatprep.subr.mxu0 0.0
        %1531 = vmatpush1.msra.mxu0 0.0
        %1532 = vmatprep.subr.mxu0 0.0
        %1533 = vmatpush1.msra.mxu0 0.0
        %1534 = vmatprep.subr.mxu0 0.0
        %1535 = vmatpush1.msra.mxu0 0.0
        %1536 = vmatprep.subr.mxu0 0.0
        %1537 = vmatpush1.msra.mxu0 0.0
        %1538 = vmatprep.subr.mxu0 0.0
        %1539 = vmatpush1.msra.mxu0 0.0
        %1540 = vmatprep.subr.mxu0 0.0
        %1541 = vmatpush1.msra.mxu0 0.0
        %1542 = vmatprep.subr.mxu0 0.0
        %1543 = vmatpush1.msra.mxu0 0.0
        %1544 = vmatprep.mubr.f32.mxu0 0.0
        %1545 = vmatmul.mubr.f32.gmra.mrb[0].mxu0 %v1475
        %v1546 = vpop.f32.mrb[0].mxu0
        %v1547 = vadd.f32 %v1467, %v1546
        %v1548 = vpop.f32.mrb[0].mxu0
        %1549 = vmatprep.mubr.f32.mxu0 0.0
        %1550 = vmatmul.mubr.f32.gmra.mrb[0].mxu0 %v1478
        %v1551 = vpop.f32.mrb[0].mxu0
        %v1552 = vadd.f32 %v1472, %v1551
        %v1553 = vpop.f32.mrb[0].mxu0
        %1554 = vdwg.mxu0
        %v1555 = vadd.f32 %v1458, %v1547
        %v1556 = vadd.f32 %v1459, %v1552
        %v1557 = vmax.f32 %v1555, 0.0
        %v1558 = vmax.f32 %v1556, 0.0
        %1559 = vst.msk [vmem:[%s377] sm:$0xff] %vm1189, %v1557
        %1560 = vst.msk [vmem:[%s377 + $0x8] sm:$0xff] %vm1189, %v1558
        %s1561 = sand.u32 %s269, 1
        %s1562 = scalar_lea.sflag [#allocation4], %s1561
        %s1563 = sand.u32 %s269, 1
        %s1564 = smul.addr %s1563, 16
        %s1565 = scalar_lea.vmem [#allocation3], %s1564
        // Predicated region
        $region65: #{tpu_custom_call.1} parent=63 // pred_check
          %p1566 = pneg %p279
        $region66: #{tpu_custom_call.1} parent=63 // pred_check_branch
          %1568 = sbr.rel (%p1566) target = $region68
        $region67: #{tpu_custom_call.1} parent=63 // pred_region
          %s1570 = ssub.s32 256, 256
          %1571 = vsyncadd %s1562, %s1570
          %s1572 = smul.addr %s25, 2
          %s1573 = smul.addr %s1572, 128
          %s1574 = scalar_lea.hbm %s11, %s1573
          %s1575 = sshll.u32 %s1565, 4
          %s1576 = int_to_ptr.vmem [resolvable:$true] %s1575
          %1581 = dma.vmem_to_hbm [thread:$0]  %s1576, 256, %s1574, %s1562, 128, 128, 8
        $region68: #{tpu_custom_call.1} parent=63 // pred_fallthru
          _
      $region64: #{tpu_custom_call.1} parent=5 // pred_fallthru
        _
      %p1582 = scmp.le.s32.totalorder 2, %s20
      // Predicated region
      $region69: #{tpu_custom_call.1} parent=5 // pred_check
        %p1583 = pneg %p1582
      $region70: #{tpu_custom_call.1} parent=5 // pred_check_branch
        %1585 = sbr.rel (%p1583) target = $region72
      $region71: #{tpu_custom_call.1} parent=5 // pred_region
        %s1586 = ssub.s32 %s20, 2
        // Predicated region
        $region73: #{tpu_custom_call.1} parent=71 // pred_check
          %p1587 = pneg %p285
        $region74: #{tpu_custom_call.1} parent=71 // pred_check_branch
          %1589 = sbr.rel (%p1587) target = $region76
        $region75: #{tpu_custom_call.1} parent=71 // pred_region
          %s1590 = sand.u32 %s270, 1
          %s1591 = scalar_lea.sflag [#allocation4], %s1590
          %s1592 = sand.u32 %s270, 1
          %s1593 = smul.addr %s1592, 16
          %s1594 = scalar_lea.vmem [#allocation3], %s1593
          %1595 = dma.done %s1591, 256
        $region76: #{tpu_custom_call.1} parent=71 // pred_fallthru
          _
      $region72: #{tpu_custom_call.1} parent=5 // pred_fallthru
        _
    $region6: #{tpu_custom_call.1} parent=1 // loop_footer
      %s24 = sadd.s32 1, %s20
    $region7: #{tpu_custom_call.1} parent=1 // loop_footer_branch
      %19 = sbr.rel target = $region3
    $region8: #{tpu_custom_call.1} parent=1 // loop_exit
      _
    %1596 = vsyncpa [#allocation4], 1
    %s1597 = scalar_lea.sflag [#allocation4], 1
    %1598 = vsyncpa %s1597, 1

</llo_original>
